<compile_context>
chip_gen: v7x
topology: tpu7x:2x2x1
jax: 0.10.0
libtpu: 0.0.40
codegen_flags: <defaults>
</compile_context>

<pallas_src>
import functools

import numpy as np
import jax
import jax.numpy as jnp
from jax.experimental import pallas as pl
from jax.experimental.pallas import tpu as pltpu

hidden_size = 30
input_size = 1
num_layers = 2
output_size = 1

NG = 4            # PyTorch gate order: i, f, g, o
SLOT = 32         # per-gate lane slot (hidden_size=30 padded to 32)
GP = NG * SLOT    # 128: all four gates packed into one lane slab
HP = SLOT         # padded hidden width (lanes 0..29 real, 30..31 zero)
BP = 8            # batch padded to one full sublane tile


# ---------------------------------------------------------------------------
# Parameters (PyTorch-style init) + packing into the kernel's lane layout
# ---------------------------------------------------------------------------
def init_raw_params(key):
    """U(-1/sqrt(H), 1/sqrt(H)) init, plain f32 layouts (for the reference)."""
    k = 1.0 / float(np.sqrt(hidden_size))
    raw = []
    for layer in range(num_layers):
        d_in = input_size if layer == 0 else hidden_size
        key, k1, k2, k3, k4 = jax.random.split(key, 5)
        wih = jax.random.uniform(k1, (d_in, NG * hidden_size), jnp.float32, -k, k)
        whh = jax.random.uniform(k2, (hidden_size, NG * hidden_size), jnp.float32, -k, k)
        b_ih = jax.random.uniform(k3, (NG * hidden_size,), jnp.float32, -k, k)
        b_hh = jax.random.uniform(k4, (NG * hidden_size,), jnp.float32, -k, k)
        raw += [wih, whh, (b_ih + b_hh).reshape(1, NG * hidden_size)]
    key, k1, k2 = jax.random.split(key, 3)
    w_fc = jax.random.uniform(k1, (hidden_size, output_size), jnp.float32, -k, k)
    b_fc = jax.random.uniform(k2, (output_size,), jnp.float32, -k, k)
    raw += [w_fc, b_fc]
    return tuple(raw)


def _pack_gate_cols(w):
    """(rows, 4*H) -> (rows, 128): gate g's H columns land at lanes 32g..32g+29."""
    rows = w.shape[0]
    out = jnp.zeros((rows, GP), w.dtype)
    for g in range(NG):
        out = out.at[:, g * SLOT: g * SLOT + hidden_size].set(
            w[:, g * hidden_size:(g + 1) * hidden_size])
    return out


def _pad_rows(w, rows_pad):
    out = jnp.zeros((rows_pad, w.shape[1]), w.dtype)
    return out.at[:w.shape[0], :].set(w)


def pack_params(raw):
    (wih0, whh0, b0, wih1, whh1, b1, w_fc, b_fc) = raw
    wih0_p = _pack_gate_cols(wih0)                                         # (1,128) f32
    b0_p = _pack_gate_cols(b0)                                             # (1,128) f32
    whh0_p = _pad_rows(_pack_gate_cols(whh0), HP).astype(jnp.bfloat16)     # (32,128)
    wih1_p = _pad_rows(_pack_gate_cols(wih1), HP).astype(jnp.bfloat16)     # (32,128)
    b1_p = _pack_gate_cols(b1)                                             # (1,128) f32
    whh1_p = _pad_rows(_pack_gate_cols(whh1), HP).astype(jnp.bfloat16)     # (32,128)
    w_fc_p = (jnp.zeros((HP, GP), jnp.float32)
              .at[:hidden_size, :output_size].set(w_fc)).astype(jnp.bfloat16)
    b_fc_p = jnp.zeros((1, GP), jnp.float32).at[0, :output_size].set(b_fc)
    return (wih0_p, b0_p, whh0_p, wih1_p, b1_p, whh1_p, w_fc_p, b_fc_p)


# ---------------------------------------------------------------------------
# Fused kernel: LSTM layer 0 -> LSTM layer 1 -> FC head, all VMEM-resident
# ---------------------------------------------------------------------------
def _fused_lstm_fc_kernel(x_ref, wih0_ref, b0_ref, whh0_ref,
                          wih1_ref, b1_ref, whh1_ref, wfc_ref, bfc_ref,
                          out_ref, *, T):
    f32, bf16 = jnp.float32, jnp.bfloat16

    def recurrence(gx, whh):
        # gx : (T*BP, 128) f32, hoisted input projection with bias folded in.
        # whh: (32, 128) bf16 (rows 30..31 zero).
        h = jnp.zeros((BP, HP), f32)
        c = jnp.zeros((BP, HP), f32)
        hs = []
        for t in range(T):                          # T static -> fully unrolled
            gates = gx[t * BP:(t + 1) * BP, :] + jnp.dot(
                h.astype(bf16), whh, preferred_element_type=f32)
            sig = 0.5 * jnp.tanh(0.5 * gates) + 0.5     # sigmoid via one EUP tanh
            th = jnp.tanh(gates)
            i_g = sig[:, 0 * SLOT:1 * SLOT]             # lane-aligned 32-wide slices
            f_g = sig[:, 1 * SLOT:2 * SLOT]
            g_g = th[:, 2 * SLOT:3 * SLOT]
            o_g = sig[:, 3 * SLOT:4 * SLOT]
            c = f_g * c + i_g * g_g                     # padded lanes stay exactly 0
            h = o_g * jnp.tanh(c)
            hs.append(h)
        return jnp.concatenate(hs, axis=0)              # (T*BP, 32), stays in vregs

    # ---- layer 0: input_size == 1 -> hoisted projection is a broadcast mul ----
    gx0 = x_ref[...] * wih0_ref[...] + b0_ref[...]      # (T*BP,1)*(1,128)+(1,128)
    h0 = recurrence(gx0, whh0_ref[...])

    # ---- layer 1: hoisted projection of the whole layer-0 hidden sequence ----
    gx1 = jnp.dot(h0.astype(bf16), wih1_ref[...],
                  preferred_element_type=f32) + b1_ref[...]
    h1 = recurrence(gx1, whh1_ref[...])

    # ---- FC head: one lane-dense (T*BP, 128) store; wrapper keeps column 0 ----
    out_ref[...] = jnp.dot(h1.astype(bf16), wfc_ref[...],
                           preferred_element_type=f32) + bfc_ref[...]


# ---------------------------------------------------------------------------
# Wrapper
# ---------------------------------------------------------------------------
@jax.jit
def lstm_regression_forward(x, params):
    """x: (B, T, input_size), batch_first, as in the PyTorch module."""
    B, T, d_in = x.shape
    # time-major, batch padded to 8 sublanes: row t*BP + b  <->  (t, b)
    x_tm = jnp.transpose(x, (1, 0, 2)).astype(jnp.float32)
    x_tm = jnp.pad(x_tm, ((0, 0), (0, BP - B), (0, 0))).reshape(T * BP, d_in)

    vmem = pl.BlockSpec(memory_space=pltpu.MemorySpace.VMEM)
    out_pad = pl.pallas_call(
        functools.partial(_fused_lstm_fc_kernel, T=T),
        out_shape=jax.ShapeDtypeStruct((T * BP, GP), jnp.float32),
        in_specs=[vmem] * 9,
        out_specs=vmem,
    )(x_tm, *params)

    y = out_pad[:, 0].reshape(T, BP)[:, :B]             # (T, B)
    return jnp.transpose(y)[:, :, None]                 # (B, T, output_size)


# ---------------------------------------------------------------------------
# Pure-JAX f32 reference (mirrors the PyTorch forward in eval mode)
# ---------------------------------------------------------------------------
def reference_forward(x, raw):
    (wih0, whh0, b0, wih1, whh1, b1, w_fc, b_fc) = raw
    H = hidden_size

    def layer(xs, wih, whh, b):
        Bb, Tt, _ = xs.shape
        h = jnp.zeros((Bb, H), jnp.float32)
        c = jnp.zeros((Bb, H), jnp.float32)
        outs = []
        for t in range(Tt):
            g = xs[:, t, :] @ wih + h @ whh + b
            i = jax.nn.sigmoid(g[:, 0:H])
            f = jax.nn.sigmoid(g[:, H:2 * H])
            gg = jnp.tanh(g[:, 2 * H:3 * H])
            o = jax.nn.sigmoid(g[:, 3 * H:4 * H])
            c = f * c + i * gg
            h = o * jnp.tanh(c)
            outs.append(h)
        return jnp.stack(outs, axis=1)

    h0 = layer(x, wih0, whh0, b0)
    h1 = layer(h0, wih1, whh1, b1)
    return h1 @ w_fc + b_fc


if __name__ == "__main__":
    key = jax.random.PRNGKey(0)
    key, pkey, xkey = jax.random.split(key, 3)

    B, T = 2, 8
    x = jax.random.normal(xkey, (B, T, input_size), jnp.float32)

    raw = init_raw_params(pkey)
    params = pack_params(raw)

    out = lstm_regression_forward(x, params)
    jax.block_until_ready(out)

    assert out.shape == (B, T, output_size), out.shape
    assert out.dtype == jnp.float32

    ref = reference_forward(x, raw)
    err = float(jnp.max(jnp.abs(out - ref)))
    assert err < 5e-2, f"max abs err vs f32 reference: {err}"

    print("KERNEL_OK")
</pallas_src>

<mosaic_0001>
module attributes {stable_mosaic.version = 11 : i64} {
  func.func @_fused_lstm_fc_kernel(%arg0: memref<64x1xf32, #tpu.memory_space<vmem>>, %arg1: memref<1x128xf32, #tpu.memory_space<vmem>>, %arg2: memref<1x128xf32, #tpu.memory_space<vmem>>, %arg3: memref<32x128xbf16, #tpu.memory_space<vmem>>, %arg4: memref<32x128xbf16, #tpu.memory_space<vmem>>, %arg5: memref<1x128xf32, #tpu.memory_space<vmem>>, %arg6: memref<32x128xbf16, #tpu.memory_space<vmem>>, %arg7: memref<32x128xbf16, #tpu.memory_space<vmem>>, %arg8: memref<1x128xf32, #tpu.memory_space<vmem>>, %arg9: memref<64x128xf32, #tpu.memory_space<vmem>>) attributes {dimension_semantics = [], scalar_prefetch = 0 : i64, scratch_operands = 0 : i64, tpu.core_type = #tpu.core_type<tc>} {
    %c0 = arith.constant 0 : index
    %c0_0 = arith.constant 0 : index
    %0 = vector.load %arg0[%c0, %c0_0] : memref<64x1xf32, #tpu.memory_space<vmem>>, vector<64x1xf32>
    %c0_1 = arith.constant 0 : index
    %c0_2 = arith.constant 0 : index
    %1 = vector.load %arg1[%c0_1, %c0_2] : memref<1x128xf32, #tpu.memory_space<vmem>>, vector<1x128xf32>
    %2 = vector.broadcast %0 : vector<64x1xf32> to vector<64x128xf32>
    %3 = vector.broadcast %1 : vector<1x128xf32> to vector<64x128xf32>
    %4 = arith.mulf %2, %3 : vector<64x128xf32>
    %c0_3 = arith.constant 0 : index
    %c0_4 = arith.constant 0 : index
    %5 = vector.load %arg2[%c0_3, %c0_4] : memref<1x128xf32, #tpu.memory_space<vmem>>, vector<1x128xf32>
    %6 = vector.broadcast %5 : vector<1x128xf32> to vector<64x128xf32>
    %7 = arith.addf %4, %6 : vector<64x128xf32>
    %c0_5 = arith.constant 0 : index
    %c0_6 = arith.constant 0 : index
    %8 = vector.load %arg3[%c0_5, %c0_6] : memref<32x128xbf16, #tpu.memory_space<vmem>>, vector<32x128xbf16>
    %cst = arith.constant 0.000000e+00 : f32
    %9 = vector.broadcast %cst : f32 to vector<8x32xf32>
    %cst_7 = arith.constant 0.000000e+00 : f32
    %10 = vector.broadcast %cst_7 : f32 to vector<8x32xf32>
    %11 = vector.extract_strided_slice %7 {offsets = [0, 0], sizes = [8, 128], strides = [1, 1]} : vector<64x128xf32> to vector<8x128xf32>
    %12 = arith.truncf %9 : vector<8x32xf32> to vector<8x32xbf16>
    %cst_8 = arith.constant dense<0.000000e+00> : vector<8x128xf32>
    %13 = tpu.matmul %12, %8, %cst_8 {dimension_numbers = #tpu.dot_dimension_numbers<[1], [0], [0], [1], [0, 0, 1, 1], [], []>} : vector<8x32xbf16>, vector<32x128xbf16>, vector<8x128xf32> -> vector<8x128xf32>
    %14 = arith.addf %11, %13 : vector<8x128xf32>
    %cst_9 = arith.constant 5.000000e-01 : f32
    %15 = vector.broadcast %cst_9 : f32 to vector<8x128xf32>
    %16 = arith.mulf %15, %14 : vector<8x128xf32>
    %17 = math.tanh %16 : vector<8x128xf32>
    %cst_10 = arith.constant 5.000000e-01 : f32
    %18 = vector.broadcast %cst_10 : f32 to vector<8x128xf32>
    %19 = arith.mulf %18, %17 : vector<8x128xf32>
    %cst_11 = arith.constant 5.000000e-01 : f32
    %20 = vector.broadcast %cst_11 : f32 to vector<8x128xf32>
    %21 = arith.addf %19, %20 : vector<8x128xf32>
    %22 = math.tanh %14 : vector<8x128xf32>
    %23 = vector.extract_strided_slice %21 {offsets = [0, 0], sizes = [8, 32], strides = [1, 1]} : vector<8x128xf32> to vector<8x32xf32>
    %24 = vector.extract_strided_slice %21 {offsets = [0, 32], sizes = [8, 32], strides = [1, 1]} : vector<8x128xf32> to vector<8x32xf32>
    %25 = vector.extract_strided_slice %22 {offsets = [0, 64], sizes = [8, 32], strides = [1, 1]} : vector<8x128xf32> to vector<8x32xf32>
    %26 = vector.extract_strided_slice %21 {offsets = [0, 96], sizes = [8, 32], strides = [1, 1]} : vector<8x128xf32> to vector<8x32xf32>
    %27 = arith.mulf %24, %10 : vector<8x32xf32>
    %28 = arith.mulf %23, %25 : vector<8x32xf32>
    %29 = arith.addf %27, %28 : vector<8x32xf32>
    %30 = math.tanh %29 : vector<8x32xf32>
    %31 = arith.mulf %26, %30 : vector<8x32xf32>
    %32 = vector.extract_strided_slice %7 {offsets = [8, 0], sizes = [8, 128], strides = [1, 1]} : vector<64x128xf32> to vector<8x128xf32>
    %33 = arith.truncf %31 : vector<8x32xf32> to vector<8x32xbf16>
    %cst_12 = arith.constant dense<0.000000e+00> : vector<8x128xf32>
    %34 = tpu.matmul %33, %8, %cst_12 {dimension_numbers = #tpu.dot_dimension_numbers<[1], [0], [0], [1], [0, 0, 1, 1], [], []>} : vector<8x32xbf16>, vector<32x128xbf16>, vector<8x128xf32> -> vector<8x128xf32>
    %35 = arith.addf %32, %34 : vector<8x128xf32>
    %cst_13 = arith.constant 5.000000e-01 : f32
    %36 = vector.broadcast %cst_13 : f32 to vector<8x128xf32>
    %37 = arith.mulf %36, %35 : vector<8x128xf32>
    %38 = math.tanh %37 : vector<8x128xf32>
    %cst_14 = arith.constant 5.000000e-01 : f32
    %39 = vector.broadcast %cst_14 : f32 to vector<8x128xf32>
    %40 = arith.mulf %39, %38 : vector<8x128xf32>
    %cst_15 = arith.constant 5.000000e-01 : f32
    %41 = vector.broadcast %cst_15 : f32 to vector<8x128xf32>
    %42 = arith.addf %40, %41 : vector<8x128xf32>
    %43 = math.tanh %35 : vector<8x128xf32>
    %44 = vector.extract_strided_slice %42 {offsets = [0, 0], sizes = [8, 32], strides = [1, 1]} : vector<8x128xf32> to vector<8x32xf32>
    %45 = vector.extract_strided_slice %42 {offsets = [0, 32], sizes = [8, 32], strides = [1, 1]} : vector<8x128xf32> to vector<8x32xf32>
    %46 = vector.extract_strided_slice %43 {offsets = [0, 64], sizes = [8, 32], strides = [1, 1]} : vector<8x128xf32> to vector<8x32xf32>
    %47 = vector.extract_strided_slice %42 {offsets = [0, 96], sizes = [8, 32], strides = [1, 1]} : vector<8x128xf32> to vector<8x32xf32>
    %48 = arith.mulf %45, %29 : vector<8x32xf32>
    %49 = arith.mulf %44, %46 : vector<8x32xf32>
    %50 = arith.addf %48, %49 : vector<8x32xf32>
    %51 = math.tanh %50 : vector<8x32xf32>
    %52 = arith.mulf %47, %51 : vector<8x32xf32>
    %53 = vector.extract_strided_slice %7 {offsets = [16, 0], sizes = [8, 128], strides = [1, 1]} : vector<64x128xf32> to vector<8x128xf32>
    %54 = arith.truncf %52 : vector<8x32xf32> to vector<8x32xbf16>
    %cst_16 = arith.constant dense<0.000000e+00> : vector<8x128xf32>
    %55 = tpu.matmul %54, %8, %cst_16 {dimension_numbers = #tpu.dot_dimension_numbers<[1], [0], [0], [1], [0, 0, 1, 1], [], []>} : vector<8x32xbf16>, vector<32x128xbf16>, vector<8x128xf32> -> vector<8x128xf32>
    %56 = arith.addf %53, %55 : vector<8x128xf32>
    %cst_17 = arith.constant 5.000000e-01 : f32
    %57 = vector.broadcast %cst_17 : f32 to vector<8x128xf32>
    %58 = arith.mulf %57, %56 : vector<8x128xf32>
    %59 = math.tanh %58 : vector<8x128xf32>
    %cst_18 = arith.constant 5.000000e-01 : f32
    %60 = vector.broadcast %cst_18 : f32 to vector<8x128xf32>
    %61 = arith.mulf %60, %59 : vector<8x128xf32>
    %cst_19 = arith.constant 5.000000e-01 : f32
    %62 = vector.broadcast %cst_19 : f32 to vector<8x128xf32>
    %63 = arith.addf %61, %62 : vector<8x128xf32>
    %64 = math.tanh %56 : vector<8x128xf32>
    %65 = vector.extract_strided_slice %63 {offsets = [0, 0], sizes = [8, 32], strides = [1, 1]} : vector<8x128xf32> to vector<8x32xf32>
    %66 = vector.extract_strided_slice %63 {offsets = [0, 32], sizes = [8, 32], strides = [1, 1]} : vector<8x128xf32> to vector<8x32xf32>
    %67 = vector.extract_strided_slice %64 {offsets = [0, 64], sizes = [8, 32], strides = [1, 1]} : vector<8x128xf32> to vector<8x32xf32>
    %68 = vector.extract_strided_slice %63 {offsets = [0, 96], sizes = [8, 32], strides = [1, 1]} : vector<8x128xf32> to vector<8x32xf32>
    %69 = arith.mulf %66, %50 : vector<8x32xf32>
    %70 = arith.mulf %65, %67 : vector<8x32xf32>
    %71 = arith.addf %69, %70 : vector<8x32xf32>
    %72 = math.tanh %71 : vector<8x32xf32>
    %73 = arith.mulf %68, %72 : vector<8x32xf32>
    %74 = vector.extract_strided_slice %7 {offsets = [24, 0], sizes = [8, 128], strides = [1, 1]} : vector<64x128xf32> to vector<8x128xf32>
    %75 = arith.truncf %73 : vector<8x32xf32> to vector<8x32xbf16>
    %cst_20 = arith.constant dense<0.000000e+00> : vector<8x128xf32>
    %76 = tpu.matmul %75, %8, %cst_20 {dimension_numbers = #tpu.dot_dimension_numbers<[1], [0], [0], [1], [0, 0, 1, 1], [], []>} : vector<8x32xbf16>, vector<32x128xbf16>, vector<8x128xf32> -> vector<8x128xf32>
    %77 = arith.addf %74, %76 : vector<8x128xf32>
    %cst_21 = arith.constant 5.000000e-01 : f32
    %78 = vector.broadcast %cst_21 : f32 to vector<8x128xf32>
    %79 = arith.mulf %78, %77 : vector<8x128xf32>
    %80 = math.tanh %79 : vector<8x128xf32>
    %cst_22 = arith.constant 5.000000e-01 : f32
    %81 = vector.broadcast %cst_22 : f32 to vector<8x128xf32>
    %82 = arith.mulf %81, %80 : vector<8x128xf32>
    %cst_23 = arith.constant 5.000000e-01 : f32
    %83 = vector.broadcast %cst_23 : f32 to vector<8x128xf32>
    %84 = arith.addf %82, %83 : vector<8x128xf32>
    %85 = math.tanh %77 : vector<8x128xf32>
    %86 = vector.extract_strided_slice %84 {offsets = [0, 0], sizes = [8, 32], strides = [1, 1]} : vector<8x128xf32> to vector<8x32xf32>
    %87 = vector.extract_strided_slice %84 {offsets = [0, 32], sizes = [8, 32], strides = [1, 1]} : vector<8x128xf32> to vector<8x32xf32>
    %88 = vector.extract_strided_slice %85 {offsets = [0, 64], sizes = [8, 32], strides = [1, 1]} : vector<8x128xf32> to vector<8x32xf32>
    %89 = vector.extract_strided_slice %84 {offsets = [0, 96], sizes = [8, 32], strides = [1, 1]} : vector<8x128xf32> to vector<8x32xf32>
    %90 = arith.mulf %87, %71 : vector<8x32xf32>
    %91 = arith.mulf %86, %88 : vector<8x32xf32>
    %92 = arith.addf %90, %91 : vector<8x32xf32>
    %93 = math.tanh %92 : vector<8x32xf32>
    %94 = arith.mulf %89, %93 : vector<8x32xf32>
    %95 = vector.extract_strided_slice %7 {offsets = [32, 0], sizes = [8, 128], strides = [1, 1]} : vector<64x128xf32> to vector<8x128xf32>
    %96 = arith.truncf %94 : vector<8x32xf32> to vector<8x32xbf16>
    %cst_24 = arith.constant dense<0.000000e+00> : vector<8x128xf32>
    %97 = tpu.matmul %96, %8, %cst_24 {dimension_numbers = #tpu.dot_dimension_numbers<[1], [0], [0], [1], [0, 0, 1, 1], [], []>} : vector<8x32xbf16>, vector<32x128xbf16>, vector<8x128xf32> -> vector<8x128xf32>
    %98 = arith.addf %95, %97 : vector<8x128xf32>
    %cst_25 = arith.constant 5.000000e-01 : f32
    %99 = vector.broadcast %cst_25 : f32 to vector<8x128xf32>
    %100 = arith.mulf %99, %98 : vector<8x128xf32>
    %101 = math.tanh %100 : vector<8x128xf32>
    %cst_26 = arith.constant 5.000000e-01 : f32
    %102 = vector.broadcast %cst_26 : f32 to vector<8x128xf32>
    %103 = arith.mulf %102, %101 : vector<8x128xf32>
    %cst_27 = arith.constant 5.000000e-01 : f32
    %104 = vector.broadcast %cst_27 : f32 to vector<8x128xf32>
    %105 = arith.addf %103, %104 : vector<8x128xf32>
    %106 = math.tanh %98 : vector<8x128xf32>
    %107 = vector.extract_strided_slice %105 {offsets = [0, 0], sizes = [8, 32], strides = [1, 1]} : vector<8x128xf32> to vector<8x32xf32>
    %108 = vector.extract_strided_slice %105 {offsets = [0, 32], sizes = [8, 32], strides = [1, 1]} : vector<8x128xf32> to vector<8x32xf32>
    %109 = vector.extract_strided_slice %106 {offsets = [0, 64], sizes = [8, 32], strides = [1, 1]} : vector<8x128xf32> to vector<8x32xf32>
    %110 = vector.extract_strided_slice %105 {offsets = [0, 96], sizes = [8, 32], strides = [1, 1]} : vector<8x128xf32> to vector<8x32xf32>
    %111 = arith.mulf %108, %92 : vector<8x32xf32>
    %112 = arith.mulf %107, %109 : vector<8x32xf32>
    %113 = arith.addf %111, %112 : vector<8x32xf32>
    %114 = math.tanh %113 : vector<8x32xf32>
    %115 = arith.mulf %110, %114 : vector<8x32xf32>
    %116 = vector.extract_strided_slice %7 {offsets = [40, 0], sizes = [8, 128], strides = [1, 1]} : vector<64x128xf32> to vector<8x128xf32>
    %117 = arith.truncf %115 : vector<8x32xf32> to vector<8x32xbf16>
    %cst_28 = arith.constant dense<0.000000e+00> : vector<8x128xf32>
    %118 = tpu.matmul %117, %8, %cst_28 {dimension_numbers = #tpu.dot_dimension_numbers<[1], [0], [0], [1], [0, 0, 1, 1], [], []>} : vector<8x32xbf16>, vector<32x128xbf16>, vector<8x128xf32> -> vector<8x128xf32>
    %119 = arith.addf %116, %118 : vector<8x128xf32>
    %cst_29 = arith.constant 5.000000e-01 : f32
    %120 = vector.broadcast %cst_29 : f32 to vector<8x128xf32>
    %121 = arith.mulf %120, %119 : vector<8x128xf32>
    %122 = math.tanh %121 : vector<8x128xf32>
    %cst_30 = arith.constant 5.000000e-01 : f32
    %123 = vector.broadcast %cst_30 : f32 to vector<8x128xf32>
    %124 = arith.mulf %123, %122 : vector<8x128xf32>
    %cst_31 = arith.constant 5.000000e-01 : f32
    %125 = vector.broadcast %cst_31 : f32 to vector<8x128xf32>
    %126 = arith.addf %124, %125 : vector<8x128xf32>
    %127 = math.tanh %119 : vector<8x128xf32>
    %128 = vector.extract_strided_slice %126 {offsets = [0, 0], sizes = [8, 32], strides = [1, 1]} : vector<8x128xf32> to vector<8x32xf32>
    %129 = vector.extract_strided_slice %126 {offsets = [0, 32], sizes = [8, 32], strides = [1, 1]} : vector<8x128xf32> to vector<8x32xf32>
    %130 = vector.extract_strided_slice %127 {offsets = [0, 64], sizes = [8, 32], strides = [1, 1]} : vector<8x128xf32> to vector<8x32xf32>
    %131 = vector.extract_strided_slice %126 {offsets = [0, 96], sizes = [8, 32], strides = [1, 1]} : vector<8x128xf32> to vector<8x32xf32>
    %132 = arith.mulf %129, %113 : vector<8x32xf32>
    %133 = arith.mulf %128, %130 : vector<8x32xf32>
    %134 = arith.addf %132, %133 : vector<8x32xf32>
    %135 = math.tanh %134 : vector<8x32xf32>
    %136 = arith.mulf %131, %135 : vector<8x32xf32>
    %137 = vector.extract_strided_slice %7 {offsets = [48, 0], sizes = [8, 128], strides = [1, 1]} : vector<64x128xf32> to vector<8x128xf32>
    %138 = arith.truncf %136 : vector<8x32xf32> to vector<8x32xbf16>
    %cst_32 = arith.constant dense<0.000000e+00> : vector<8x128xf32>
    %139 = tpu.matmul %138, %8, %cst_32 {dimension_numbers = #tpu.dot_dimension_numbers<[1], [0], [0], [1], [0, 0, 1, 1], [], []>} : vector<8x32xbf16>, vector<32x128xbf16>, vector<8x128xf32> -> vector<8x128xf32>
    %140 = arith.addf %137, %139 : vector<8x128xf32>
    %cst_33 = arith.constant 5.000000e-01 : f32
    %141 = vector.broadcast %cst_33 : f32 to vector<8x128xf32>
    %142 = arith.mulf %141, %140 : vector<8x128xf32>
    %143 = math.tanh %142 : vector<8x128xf32>
    %cst_34 = arith.constant 5.000000e-01 : f32
    %144 = vector.broadcast %cst_34 : f32 to vector<8x128xf32>
    %145 = arith.mulf %144, %143 : vector<8x128xf32>
    %cst_35 = arith.constant 5.000000e-01 : f32
    %146 = vector.broadcast %cst_35 : f32 to vector<8x128xf32>
    %147 = arith.addf %145, %146 : vector<8x128xf32>
    %148 = math.tanh %140 : vector<8x128xf32>
    %149 = vector.extract_strided_slice %147 {offsets = [0, 0], sizes = [8, 32], strides = [1, 1]} : vector<8x128xf32> to vector<8x32xf32>
    %150 = vector.extract_strided_slice %147 {offsets = [0, 32], sizes = [8, 32], strides = [1, 1]} : vector<8x128xf32> to vector<8x32xf32>
    %151 = vector.extract_strided_slice %148 {offsets = [0, 64], sizes = [8, 32], strides = [1, 1]} : vector<8x128xf32> to vector<8x32xf32>
    %152 = vector.extract_strided_slice %147 {offsets = [0, 96], sizes = [8, 32], strides = [1, 1]} : vector<8x128xf32> to vector<8x32xf32>
    %153 = arith.mulf %150, %134 : vector<8x32xf32>
    %154 = arith.mulf %149, %151 : vector<8x32xf32>
    %155 = arith.addf %153, %154 : vector<8x32xf32>
    %156 = math.tanh %155 : vector<8x32xf32>
    %157 = arith.mulf %152, %156 : vector<8x32xf32>
    %158 = vector.extract_strided_slice %7 {offsets = [56, 0], sizes = [8, 128], strides = [1, 1]} : vector<64x128xf32> to vector<8x128xf32>
    %159 = arith.truncf %157 : vector<8x32xf32> to vector<8x32xbf16>
    %cst_36 = arith.constant dense<0.000000e+00> : vector<8x128xf32>
    %160 = tpu.matmul %159, %8, %cst_36 {dimension_numbers = #tpu.dot_dimension_numbers<[1], [0], [0], [1], [0, 0, 1, 1], [], []>} : vector<8x32xbf16>, vector<32x128xbf16>, vector<8x128xf32> -> vector<8x128xf32>
    %161 = arith.addf %158, %160 : vector<8x128xf32>
    %cst_37 = arith.constant 5.000000e-01 : f32
    %162 = vector.broadcast %cst_37 : f32 to vector<8x128xf32>
    %163 = arith.mulf %162, %161 : vector<8x128xf32>
    %164 = math.tanh %163 : vector<8x128xf32>
    %cst_38 = arith.constant 5.000000e-01 : f32
    %165 = vector.broadcast %cst_38 : f32 to vector<8x128xf32>
    %166 = arith.mulf %165, %164 : vector<8x128xf32>
    %cst_39 = arith.constant 5.000000e-01 : f32
    %167 = vector.broadcast %cst_39 : f32 to vector<8x128xf32>
    %168 = arith.addf %166, %167 : vector<8x128xf32>
    %169 = math.tanh %161 : vector<8x128xf32>
    %170 = vector.extract_strided_slice %168 {offsets = [0, 0], sizes = [8, 32], strides = [1, 1]} : vector<8x128xf32> to vector<8x32xf32>
    %171 = vector.extract_strided_slice %168 {offsets = [0, 32], sizes = [8, 32], strides = [1, 1]} : vector<8x128xf32> to vector<8x32xf32>
    %172 = vector.extract_strided_slice %169 {offsets = [0, 64], sizes = [8, 32], strides = [1, 1]} : vector<8x128xf32> to vector<8x32xf32>
    %173 = vector.extract_strided_slice %168 {offsets = [0, 96], sizes = [8, 32], strides = [1, 1]} : vector<8x128xf32> to vector<8x32xf32>
    %174 = arith.mulf %171, %155 : vector<8x32xf32>
    %175 = arith.mulf %170, %172 : vector<8x32xf32>
    %176 = arith.addf %174, %175 : vector<8x32xf32>
    %177 = math.tanh %176 : vector<8x32xf32>
    %178 = arith.mulf %173, %177 : vector<8x32xf32>
    %179 = tpu.concatenate %31, %52, %73, %94, %115, %136, %157, %178 in 0 : vector<8x32xf32>, vector<8x32xf32>, vector<8x32xf32>, vector<8x32xf32>, vector<8x32xf32>, vector<8x32xf32>, vector<8x32xf32>, vector<8x32xf32> -> vector<64x32xf32>
    %180 = arith.truncf %179 : vector<64x32xf32> to vector<64x32xbf16>
    %c0_40 = arith.constant 0 : index
    %c0_41 = arith.constant 0 : index
    %181 = vector.load %arg4[%c0_40, %c0_41] : memref<32x128xbf16, #tpu.memory_space<vmem>>, vector<32x128xbf16>
    %cst_42 = arith.constant dense<0.000000e+00> : vector<64x128xf32>
    %182 = tpu.matmul %180, %181, %cst_42 {dimension_numbers = #tpu.dot_dimension_numbers<[1], [0], [0], [1], [0, 0, 1, 1], [], []>} : vector<64x32xbf16>, vector<32x128xbf16>, vector<64x128xf32> -> vector<64x128xf32>
    %c0_43 = arith.constant 0 : index
    %c0_44 = arith.constant 0 : index
    %183 = vector.load %arg5[%c0_43, %c0_44] : memref<1x128xf32, #tpu.memory_space<vmem>>, vector<1x128xf32>
    %184 = vector.broadcast %183 : vector<1x128xf32> to vector<64x128xf32>
    %185 = arith.addf %182, %184 : vector<64x128xf32>
    %c0_45 = arith.constant 0 : index
    %c0_46 = arith.constant 0 : index
    %186 = vector.load %arg6[%c0_45, %c0_46] : memref<32x128xbf16, #tpu.memory_space<vmem>>, vector<32x128xbf16>
    %cst_47 = arith.constant 0.000000e+00 : f32
    %187 = vector.broadcast %cst_47 : f32 to vector<8x32xf32>
    %cst_48 = arith.constant 0.000000e+00 : f32
    %188 = vector.broadcast %cst_48 : f32 to vector<8x32xf32>
    %189 = vector.extract_strided_slice %185 {offsets = [0, 0], sizes = [8, 128], strides = [1, 1]} : vector<64x128xf32> to vector<8x128xf32>
    %190 = arith.truncf %187 : vector<8x32xf32> to vector<8x32xbf16>
    %cst_49 = arith.constant dense<0.000000e+00> : vector<8x128xf32>
    %191 = tpu.matmul %190, %186, %cst_49 {dimension_numbers = #tpu.dot_dimension_numbers<[1], [0], [0], [1], [0, 0, 1, 1], [], []>} : vector<8x32xbf16>, vector<32x128xbf16>, vector<8x128xf32> -> vector<8x128xf32>
    %192 = arith.addf %189, %191 : vector<8x128xf32>
    %cst_50 = arith.constant 5.000000e-01 : f32
    %193 = vector.broadcast %cst_50 : f32 to vector<8x128xf32>
    %194 = arith.mulf %193, %192 : vector<8x128xf32>
    %195 = math.tanh %194 : vector<8x128xf32>
    %cst_51 = arith.constant 5.000000e-01 : f32
    %196 = vector.broadcast %cst_51 : f32 to vector<8x128xf32>
    %197 = arith.mulf %196, %195 : vector<8x128xf32>
    %cst_52 = arith.constant 5.000000e-01 : f32
    %198 = vector.broadcast %cst_52 : f32 to vector<8x128xf32>
    %199 = arith.addf %197, %198 : vector<8x128xf32>
    %200 = math.tanh %192 : vector<8x128xf32>
    %201 = vector.extract_strided_slice %199 {offsets = [0, 0], sizes = [8, 32], strides = [1, 1]} : vector<8x128xf32> to vector<8x32xf32>
    %202 = vector.extract_strided_slice %199 {offsets = [0, 32], sizes = [8, 32], strides = [1, 1]} : vector<8x128xf32> to vector<8x32xf32>
    %203 = vector.extract_strided_slice %200 {offsets = [0, 64], sizes = [8, 32], strides = [1, 1]} : vector<8x128xf32> to vector<8x32xf32>
    %204 = vector.extract_strided_slice %199 {offsets = [0, 96], sizes = [8, 32], strides = [1, 1]} : vector<8x128xf32> to vector<8x32xf32>
    %205 = arith.mulf %202, %188 : vector<8x32xf32>
    %206 = arith.mulf %201, %203 : vector<8x32xf32>
    %207 = arith.addf %205, %206 : vector<8x32xf32>
    %208 = math.tanh %207 : vector<8x32xf32>
    %209 = arith.mulf %204, %208 : vector<8x32xf32>
    %210 = vector.extract_strided_slice %185 {offsets = [8, 0], sizes = [8, 128], strides = [1, 1]} : vector<64x128xf32> to vector<8x128xf32>
    %211 = arith.truncf %209 : vector<8x32xf32> to vector<8x32xbf16>
    %cst_53 = arith.constant dense<0.000000e+00> : vector<8x128xf32>
    %212 = tpu.matmul %211, %186, %cst_53 {dimension_numbers = #tpu.dot_dimension_numbers<[1], [0], [0], [1], [0, 0, 1, 1], [], []>} : vector<8x32xbf16>, vector<32x128xbf16>, vector<8x128xf32> -> vector<8x128xf32>
    %213 = arith.addf %210, %212 : vector<8x128xf32>
    %cst_54 = arith.constant 5.000000e-01 : f32
    %214 = vector.broadcast %cst_54 : f32 to vector<8x128xf32>
    %215 = arith.mulf %214, %213 : vector<8x128xf32>
    %216 = math.tanh %215 : vector<8x128xf32>
    %cst_55 = arith.constant 5.000000e-01 : f32
    %217 = vector.broadcast %cst_55 : f32 to vector<8x128xf32>
    %218 = arith.mulf %217, %216 : vector<8x128xf32>
    %cst_56 = arith.constant 5.000000e-01 : f32
    %219 = vector.broadcast %cst_56 : f32 to vector<8x128xf32>
    %220 = arith.addf %218, %219 : vector<8x128xf32>
    %221 = math.tanh %213 : vector<8x128xf32>
    %222 = vector.extract_strided_slice %220 {offsets = [0, 0], sizes = [8, 32], strides = [1, 1]} : vector<8x128xf32> to vector<8x32xf32>
    %223 = vector.extract_strided_slice %220 {offsets = [0, 32], sizes = [8, 32], strides = [1, 1]} : vector<8x128xf32> to vector<8x32xf32>
    %224 = vector.extract_strided_slice %221 {offsets = [0, 64], sizes = [8, 32], strides = [1, 1]} : vector<8x128xf32> to vector<8x32xf32>
    %225 = vector.extract_strided_slice %220 {offsets = [0, 96], sizes = [8, 32], strides = [1, 1]} : vector<8x128xf32> to vector<8x32xf32>
    %226 = arith.mulf %223, %207 : vector<8x32xf32>
    %227 = arith.mulf %222, %224 : vector<8x32xf32>
    %228 = arith.addf %226, %227 : vector<8x32xf32>
    %229 = math.tanh %228 : vector<8x32xf32>
    %230 = arith.mulf %225, %229 : vector<8x32xf32>
    %231 = vector.extract_strided_slice %185 {offsets = [16, 0], sizes = [8, 128], strides = [1, 1]} : vector<64x128xf32> to vector<8x128xf32>
    %232 = arith.truncf %230 : vector<8x32xf32> to vector<8x32xbf16>
    %cst_57 = arith.constant dense<0.000000e+00> : vector<8x128xf32>
    %233 = tpu.matmul %232, %186, %cst_57 {dimension_numbers = #tpu.dot_dimension_numbers<[1], [0], [0], [1], [0, 0, 1, 1], [], []>} : vector<8x32xbf16>, vector<32x128xbf16>, vector<8x128xf32> -> vector<8x128xf32>
    %234 = arith.addf %231, %233 : vector<8x128xf32>
    %cst_58 = arith.constant 5.000000e-01 : f32
    %235 = vector.broadcast %cst_58 : f32 to vector<8x128xf32>
    %236 = arith.mulf %235, %234 : vector<8x128xf32>
    %237 = math.tanh %236 : vector<8x128xf32>
    %cst_59 = arith.constant 5.000000e-01 : f32
    %238 = vector.broadcast %cst_59 : f32 to vector<8x128xf32>
    %239 = arith.mulf %238, %237 : vector<8x128xf32>
    %cst_60 = arith.constant 5.000000e-01 : f32
    %240 = vector.broadcast %cst_60 : f32 to vector<8x128xf32>
    %241 = arith.addf %239, %240 : vector<8x128xf32>
    %242 = math.tanh %234 : vector<8x128xf32>
    %243 = vector.extract_strided_slice %241 {offsets = [0, 0], sizes = [8, 32], strides = [1, 1]} : vector<8x128xf32> to vector<8x32xf32>
    %244 = vector.extract_strided_slice %241 {offsets = [0, 32], sizes = [8, 32], strides = [1, 1]} : vector<8x128xf32> to vector<8x32xf32>
    %245 = vector.extract_strided_slice %242 {offsets = [0, 64], sizes = [8, 32], strides = [1, 1]} : vector<8x128xf32> to vector<8x32xf32>
    %246 = vector.extract_strided_slice %241 {offsets = [0, 96], sizes = [8, 32], strides = [1, 1]} : vector<8x128xf32> to vector<8x32xf32>
    %247 = arith.mulf %244, %228 : vector<8x32xf32>
    %248 = arith.mulf %243, %245 : vector<8x32xf32>
    %249 = arith.addf %247, %248 : vector<8x32xf32>
    %250 = math.tanh %249 : vector<8x32xf32>
    %251 = arith.mulf %246, %250 : vector<8x32xf32>
    %252 = vector.extract_strided_slice %185 {offsets = [24, 0], sizes = [8, 128], strides = [1, 1]} : vector<64x128xf32> to vector<8x128xf32>
    %253 = arith.truncf %251 : vector<8x32xf32> to vector<8x32xbf16>
    %cst_61 = arith.constant dense<0.000000e+00> : vector<8x128xf32>
    %254 = tpu.matmul %253, %186, %cst_61 {dimension_numbers = #tpu.dot_dimension_numbers<[1], [0], [0], [1], [0, 0, 1, 1], [], []>} : vector<8x32xbf16>, vector<32x128xbf16>, vector<8x128xf32> -> vector<8x128xf32>
    %255 = arith.addf %252, %254 : vector<8x128xf32>
    %cst_62 = arith.constant 5.000000e-01 : f32
    %256 = vector.broadcast %cst_62 : f32 to vector<8x128xf32>
    %257 = arith.mulf %256, %255 : vector<8x128xf32>
    %258 = math.tanh %257 : vector<8x128xf32>
    %cst_63 = arith.constant 5.000000e-01 : f32
    %259 = vector.broadcast %cst_63 : f32 to vector<8x128xf32>
    %260 = arith.mulf %259, %258 : vector<8x128xf32>
    %cst_64 = arith.constant 5.000000e-01 : f32
    %261 = vector.broadcast %cst_64 : f32 to vector<8x128xf32>
    %262 = arith.addf %260, %261 : vector<8x128xf32>
    %263 = math.tanh %255 : vector<8x128xf32>
    %264 = vector.extract_strided_slice %262 {offsets = [0, 0], sizes = [8, 32], strides = [1, 1]} : vector<8x128xf32> to vector<8x32xf32>
    %265 = vector.extract_strided_slice %262 {offsets = [0, 32], sizes = [8, 32], strides = [1, 1]} : vector<8x128xf32> to vector<8x32xf32>
    %266 = vector.extract_strided_slice %263 {offsets = [0, 64], sizes = [8, 32], strides = [1, 1]} : vector<8x128xf32> to vector<8x32xf32>
    %267 = vector.extract_strided_slice %262 {offsets = [0, 96], sizes = [8, 32], strides = [1, 1]} : vector<8x128xf32> to vector<8x32xf32>
    %268 = arith.mulf %265, %249 : vector<8x32xf32>
    %269 = arith.mulf %264, %266 : vector<8x32xf32>
    %270 = arith.addf %268, %269 : vector<8x32xf32>
    %271 = math.tanh %270 : vector<8x32xf32>
    %272 = arith.mulf %267, %271 : vector<8x32xf32>
    %273 = vector.extract_strided_slice %185 {offsets = [32, 0], sizes = [8, 128], strides = [1, 1]} : vector<64x128xf32> to vector<8x128xf32>
    %274 = arith.truncf %272 : vector<8x32xf32> to vector<8x32xbf16>
    %cst_65 = arith.constant dense<0.000000e+00> : vector<8x128xf32>
    %275 = tpu.matmul %274, %186, %cst_65 {dimension_numbers = #tpu.dot_dimension_numbers<[1], [0], [0], [1], [0, 0, 1, 1], [], []>} : vector<8x32xbf16>, vector<32x128xbf16>, vector<8x128xf32> -> vector<8x128xf32>
    %276 = arith.addf %273, %275 : vector<8x128xf32>
    %cst_66 = arith.constant 5.000000e-01 : f32
    %277 = vector.broadcast %cst_66 : f32 to vector<8x128xf32>
    %278 = arith.mulf %277, %276 : vector<8x128xf32>
    %279 = math.tanh %278 : vector<8x128xf32>
    %cst_67 = arith.constant 5.000000e-01 : f32
    %280 = vector.broadcast %cst_67 : f32 to vector<8x128xf32>
    %281 = arith.mulf %280, %279 : vector<8x128xf32>
    %cst_68 = arith.constant 5.000000e-01 : f32
    %282 = vector.broadcast %cst_68 : f32 to vector<8x128xf32>
    %283 = arith.addf %281, %282 : vector<8x128xf32>
    %284 = math.tanh %276 : vector<8x128xf32>
    %285 = vector.extract_strided_slice %283 {offsets = [0, 0], sizes = [8, 32], strides = [1, 1]} : vector<8x128xf32> to vector<8x32xf32>
    %286 = vector.extract_strided_slice %283 {offsets = [0, 32], sizes = [8, 32], strides = [1, 1]} : vector<8x128xf32> to vector<8x32xf32>
    %287 = vector.extract_strided_slice %284 {offsets = [0, 64], sizes = [8, 32], strides = [1, 1]} : vector<8x128xf32> to vector<8x32xf32>
    %288 = vector.extract_strided_slice %283 {offsets = [0, 96], sizes = [8, 32], strides = [1, 1]} : vector<8x128xf32> to vector<8x32xf32>
    %289 = arith.mulf %286, %270 : vector<8x32xf32>
    %290 = arith.mulf %285, %287 : vector<8x32xf32>
    %291 = arith.addf %289, %290 : vector<8x32xf32>
    %292 = math.tanh %291 : vector<8x32xf32>
    %293 = arith.mulf %288, %292 : vector<8x32xf32>
    %294 = vector.extract_strided_slice %185 {offsets = [40, 0], sizes = [8, 128], strides = [1, 1]} : vector<64x128xf32> to vector<8x128xf32>
    %295 = arith.truncf %293 : vector<8x32xf32> to vector<8x32xbf16>
    %cst_69 = arith.constant dense<0.000000e+00> : vector<8x128xf32>
    %296 = tpu.matmul %295, %186, %cst_69 {dimension_numbers = #tpu.dot_dimension_numbers<[1], [0], [0], [1], [0, 0, 1, 1], [], []>} : vector<8x32xbf16>, vector<32x128xbf16>, vector<8x128xf32> -> vector<8x128xf32>
    %297 = arith.addf %294, %296 : vector<8x128xf32>
    %cst_70 = arith.constant 5.000000e-01 : f32
    %298 = vector.broadcast %cst_70 : f32 to vector<8x128xf32>
    %299 = arith.mulf %298, %297 : vector<8x128xf32>
    %300 = math.tanh %299 : vector<8x128xf32>
    %cst_71 = arith.constant 5.000000e-01 : f32
    %301 = vector.broadcast %cst_71 : f32 to vector<8x128xf32>
    %302 = arith.mulf %301, %300 : vector<8x128xf32>
    %cst_72 = arith.constant 5.000000e-01 : f32
    %303 = vector.broadcast %cst_72 : f32 to vector<8x128xf32>
    %304 = arith.addf %302, %303 : vector<8x128xf32>
    %305 = math.tanh %297 : vector<8x128xf32>
    %306 = vector.extract_strided_slice %304 {offsets = [0, 0], sizes = [8, 32], strides = [1, 1]} : vector<8x128xf32> to vector<8x32xf32>
    %307 = vector.extract_strided_slice %304 {offsets = [0, 32], sizes = [8, 32], strides = [1, 1]} : vector<8x128xf32> to vector<8x32xf32>
    %308 = vector.extract_strided_slice %305 {offsets = [0, 64], sizes = [8, 32], strides = [1, 1]} : vector<8x128xf32> to vector<8x32xf32>
    %309 = vector.extract_strided_slice %304 {offsets = [0, 96], sizes = [8, 32], strides = [1, 1]} : vector<8x128xf32> to vector<8x32xf32>
    %310 = arith.mulf %307, %291 : vector<8x32xf32>
    %311 = arith.mulf %306, %308 : vector<8x32xf32>
    %312 = arith.addf %310, %311 : vector<8x32xf32>
    %313 = math.tanh %312 : vector<8x32xf32>
    %314 = arith.mulf %309, %313 : vector<8x32xf32>
    %315 = vector.extract_strided_slice %185 {offsets = [48, 0], sizes = [8, 128], strides = [1, 1]} : vector<64x128xf32> to vector<8x128xf32>
    %316 = arith.truncf %314 : vector<8x32xf32> to vector<8x32xbf16>
    %cst_73 = arith.constant dense<0.000000e+00> : vector<8x128xf32>
    %317 = tpu.matmul %316, %186, %cst_73 {dimension_numbers = #tpu.dot_dimension_numbers<[1], [0], [0], [1], [0, 0, 1, 1], [], []>} : vector<8x32xbf16>, vector<32x128xbf16>, vector<8x128xf32> -> vector<8x128xf32>
    %318 = arith.addf %315, %317 : vector<8x128xf32>
    %cst_74 = arith.constant 5.000000e-01 : f32
    %319 = vector.broadcast %cst_74 : f32 to vector<8x128xf32>
    %320 = arith.mulf %319, %318 : vector<8x128xf32>
    %321 = math.tanh %320 : vector<8x128xf32>
    %cst_75 = arith.constant 5.000000e-01 : f32
    %322 = vector.broadcast %cst_75 : f32 to vector<8x128xf32>
    %323 = arith.mulf %322, %321 : vector<8x128xf32>
    %cst_76 = arith.constant 5.000000e-01 : f32
    %324 = vector.broadcast %cst_76 : f32 to vector<8x128xf32>
    %325 = arith.addf %323, %324 : vector<8x128xf32>
    %326 = math.tanh %318 : vector<8x128xf32>
    %327 = vector.extract_strided_slice %325 {offsets = [0, 0], sizes = [8, 32], strides = [1, 1]} : vector<8x128xf32> to vector<8x32xf32>
    %328 = vector.extract_strided_slice %325 {offsets = [0, 32], sizes = [8, 32], strides = [1, 1]} : vector<8x128xf32> to vector<8x32xf32>
    %329 = vector.extract_strided_slice %326 {offsets = [0, 64], sizes = [8, 32], strides = [1, 1]} : vector<8x128xf32> to vector<8x32xf32>
    %330 = vector.extract_strided_slice %325 {offsets = [0, 96], sizes = [8, 32], strides = [1, 1]} : vector<8x128xf32> to vector<8x32xf32>
    %331 = arith.mulf %328, %312 : vector<8x32xf32>
    %332 = arith.mulf %327, %329 : vector<8x32xf32>
    %333 = arith.addf %331, %332 : vector<8x32xf32>
    %334 = math.tanh %333 : vector<8x32xf32>
    %335 = arith.mulf %330, %334 : vector<8x32xf32>
    %336 = vector.extract_strided_slice %185 {offsets = [56, 0], sizes = [8, 128], strides = [1, 1]} : vector<64x128xf32> to vector<8x128xf32>
    %337 = arith.truncf %335 : vector<8x32xf32> to vector<8x32xbf16>
    %cst_77 = arith.constant dense<0.000000e+00> : vector<8x128xf32>
    %338 = tpu.matmul %337, %186, %cst_77 {dimension_numbers = #tpu.dot_dimension_numbers<[1], [0], [0], [1], [0, 0, 1, 1], [], []>} : vector<8x32xbf16>, vector<32x128xbf16>, vector<8x128xf32> -> vector<8x128xf32>
    %339 = arith.addf %336, %338 : vector<8x128xf32>
    %cst_78 = arith.constant 5.000000e-01 : f32
    %340 = vector.broadcast %cst_78 : f32 to vector<8x128xf32>
    %341 = arith.mulf %340, %339 : vector<8x128xf32>
    %342 = math.tanh %341 : vector<8x128xf32>
    %cst_79 = arith.constant 5.000000e-01 : f32
    %343 = vector.broadcast %cst_79 : f32 to vector<8x128xf32>
    %344 = arith.mulf %343, %342 : vector<8x128xf32>
    %cst_80 = arith.constant 5.000000e-01 : f32
    %345 = vector.broadcast %cst_80 : f32 to vector<8x128xf32>
    %346 = arith.addf %344, %345 : vector<8x128xf32>
    %347 = math.tanh %339 : vector<8x128xf32>
    %348 = vector.extract_strided_slice %346 {offsets = [0, 0], sizes = [8, 32], strides = [1, 1]} : vector<8x128xf32> to vector<8x32xf32>
    %349 = vector.extract_strided_slice %346 {offsets = [0, 32], sizes = [8, 32], strides = [1, 1]} : vector<8x128xf32> to vector<8x32xf32>
    %350 = vector.extract_strided_slice %347 {offsets = [0, 64], sizes = [8, 32], strides = [1, 1]} : vector<8x128xf32> to vector<8x32xf32>
    %351 = vector.extract_strided_slice %346 {offsets = [0, 96], sizes = [8, 32], strides = [1, 1]} : vector<8x128xf32> to vector<8x32xf32>
    %352 = arith.mulf %349, %333 : vector<8x32xf32>
    %353 = arith.mulf %348, %350 : vector<8x32xf32>
    %354 = arith.addf %352, %353 : vector<8x32xf32>
    %355 = math.tanh %354 : vector<8x32xf32>
    %356 = arith.mulf %351, %355 : vector<8x32xf32>
    %357 = tpu.concatenate %209, %230, %251, %272, %293, %314, %335, %356 in 0 : vector<8x32xf32>, vector<8x32xf32>, vector<8x32xf32>, vector<8x32xf32>, vector<8x32xf32>, vector<8x32xf32>, vector<8x32xf32>, vector<8x32xf32> -> vector<64x32xf32>
    %358 = arith.truncf %357 : vector<64x32xf32> to vector<64x32xbf16>
    %c0_81 = arith.constant 0 : index
    %c0_82 = arith.constant 0 : index
    %359 = vector.load %arg7[%c0_81, %c0_82] : memref<32x128xbf16, #tpu.memory_space<vmem>>, vector<32x128xbf16>
    %cst_83 = arith.constant dense<0.000000e+00> : vector<64x128xf32>
    %360 = tpu.matmul %358, %359, %cst_83 {dimension_numbers = #tpu.dot_dimension_numbers<[1], [0], [0], [1], [0, 0, 1, 1], [], []>} : vector<64x32xbf16>, vector<32x128xbf16>, vector<64x128xf32> -> vector<64x128xf32>
    %c0_84 = arith.constant 0 : index
    %c0_85 = arith.constant 0 : index
    %361 = vector.load %arg8[%c0_84, %c0_85] : memref<1x128xf32, #tpu.memory_space<vmem>>, vector<1x128xf32>
    %362 = vector.broadcast %361 : vector<1x128xf32> to vector<64x128xf32>
    %363 = arith.addf %360, %362 : vector<64x128xf32>
    %c0_86 = arith.constant 0 : index
    %c0_87 = arith.constant 0 : index
    %364 = vector.load %arg9[%c0_86, %c0_87] : memref<64x128xf32, #tpu.memory_space<vmem>>, vector<64x128xf32>
    tpu.vector_store %arg9[%c0_86, %c0_87], %363 {strides = array<i32>} : memref<64x128xf32, #tpu.memory_space<vmem>>, vector<64x128xf32>,
    return
  }
}

</mosaic_0001>

<llo_original>
// kernel: squeeze.1
$region0: #{squeeze.1}
  %s0 = inlined_call_operand.vmem [shape: f32[64], index: 0, kind: input, shape index: {}]
  %s1 = inlined_call_operand.vmem [shape: f32[8,8], index: 1, kind: output, shape index: {}]
  $region1: #{squeeze.1} parent=0
    #allocation0 [shape = 'u8[4096]{0}', space=vmem, size = 0x1000, scoped, tag = 'scoped mem for input reshape']
    %s3 = sshllo.u32 0, 1
    %v4 = vld [vmem:[%s0] sm:%s3]
    %5 = vst [vmem:[#allocation0] sm:%s3] %v4
    %v6 = vld [vmem:[#allocation0] sm:$0x1]
    %vm7 = vcmask 64512
    %8 = vst.msk [vmem:[%s1] sm:$0x1] %vm7, %v6
    %v9 = vld [vmem:[#allocation0] sm:$0x1]
    %10 = vrot.lane.b32.xlu0 %v9, 120
    %v11 = vpop.permute.xlu0 %10
    %vm12 = vcmask 64512
    %s13 = scalar_lea.vmem %s1, 1
    %14 = vst.msk [vmem:[%s13] sm:$0x1] %vm12, %v11
    %v15 = vld [vmem:[#allocation0] sm:$0x1]
    %16 = vrot.lane.b32.xlu0 %v15, 112
    %v17 = vpop.permute.xlu0 %16
    %vm18 = vcmask 64512
    %s19 = scalar_lea.vmem %s1, 2
    %20 = vst.msk [vmem:[%s19] sm:$0x1] %vm18, %v17
    %v21 = vld [vmem:[#allocation0] sm:$0x1]
    %22 = vrot.lane.b32.xlu0 %v21, 104
    %v23 = vpop.permute.xlu0 %22
    %vm24 = vcmask 64512
    %s25 = scalar_lea.vmem %s1, 3
    %26 = vst.msk [vmem:[%s25] sm:$0x1] %vm24, %v23
    %v27 = vld [vmem:[#allocation0] sm:$0x1]
    %28 = vrot.lane.b32.xlu0 %v27, 96
    %v29 = vpop.permute.xlu0 %28
    %vm30 = vcmask 64512
    %s31 = scalar_lea.vmem %s1, 4
    %32 = vst.msk [vmem:[%s31] sm:$0x1] %vm30, %v29
    %v33 = vld [vmem:[#allocation0] sm:$0x1]
    %34 = vrot.lane.b32.xlu0 %v33, 88
    %v35 = vpop.permute.xlu0 %34
    %vm36 = vcmask 64512
    %s37 = scalar_lea.vmem %s1, 5
    %38 = vst.msk [vmem:[%s37] sm:$0x1] %vm36, %v35
    %v39 = vld [vmem:[#allocation0] sm:$0x1]
    %40 = vrot.lane.b32.xlu0 %v39, 80
    %v41 = vpop.permute.xlu0 %40
    %vm42 = vcmask 64512
    %s43 = scalar_lea.vmem %s1, 6
    %44 = vst.msk [vmem:[%s43] sm:$0x1] %vm42, %v41
    %v45 = vld [vmem:[#allocation0] sm:$0x1]
    %46 = vrot.lane.b32.xlu0 %v45, 72
    %v47 = vpop.permute.xlu0 %46
    %vm48 = vcmask 64512
    %s49 = scalar_lea.vmem %s1, 7
    %50 = vst.msk [vmem:[%s49] sm:$0x1] %vm48, %v47

// kernel: lstm_regression_forward.1
$region0: #{lstm_regression_forward.1}
  #allocation0 [shape = 'u32[]', space=smem, size = 0x4, offset = 0x4, fixed_abs, tag = 'smem constant byte address 0x4 - core index']
  #allocation1 [shape = 'u32[144,128]{1,0:T(1,128)}', space=vmem, size = 0x12000, scoped, tag = 'internal scratch']
  %s0 = inlined_call_operand.vmem [shape: f32[64,1], index: 0, kind: input, shape index: {}]
  %s1 = inlined_call_operand.vmem [shape: f32[1,128], index: 1, kind: input, shape index: {}]
  %s2 = inlined_call_operand.vmem [shape: f32[1,128], index: 2, kind: input, shape index: {}]
  %s3 = inlined_call_operand.vmem [shape: bf16[32,128], index: 3, kind: input, shape index: {}]
  %s4 = inlined_call_operand.vmem [shape: bf16[32,128], index: 4, kind: input, shape index: {}]
  %s5 = inlined_call_operand.vmem [shape: f32[1,128], index: 5, kind: input, shape index: {}]
  %s6 = inlined_call_operand.vmem [shape: bf16[32,128], index: 6, kind: input, shape index: {}]
  %s7 = inlined_call_operand.vmem [shape: bf16[32,128], index: 7, kind: input, shape index: {}]
  %s8 = inlined_call_operand.vmem [shape: f32[1,128], index: 8, kind: input, shape index: {}]
  %s9 = inlined_call_operand.vmem [shape: f32[64,128], index: 9, kind: output, shape index: {}]
  %s10 = sld [smem:[#allocation0]]
  $region46: #{lstm_regression_forward.1} parent=0
    _
  %s12 = ssub.s32 1, %s10
  %s13 = scalar_select 0, %s12, %s10
  // Predicated region
  $region2: #{lstm_regression_forward.1} parent=0 // pred_check
    _
  $region3: #{lstm_regression_forward.1} parent=0 // pred_check_branch
    %15 = sbr.rel (0) target = $region5
  $region4: #{lstm_regression_forward.1} parent=0 // pred_region
    _
  $region5: #{lstm_regression_forward.1} parent=0 // pred_fallthru
    _
  // Predicated region
  $region6: #{lstm_regression_forward.1} parent=0 // pred_check
    _
  $region7: #{lstm_regression_forward.1} parent=0 // pred_check_branch
    %17 = sbr.rel (0) target = $region9
  $region8: #{lstm_regression_forward.1} parent=0 // pred_region
    _
  $region9: #{lstm_regression_forward.1} parent=0 // pred_fallthru
    _
  // Predicated region
  $region10: #{lstm_regression_forward.1} parent=0 // pred_check
    _
  $region11: #{lstm_regression_forward.1} parent=0 // pred_check_branch
    %19 = sbr.rel (0) target = $region13
  $region12: #{lstm_regression_forward.1} parent=0 // pred_region
    _
  $region13: #{lstm_regression_forward.1} parent=0 // pred_fallthru
    _
  // Predicated region
  $region14: #{lstm_regression_forward.1} parent=0 // pred_check
    _
  $region15: #{lstm_regression_forward.1} parent=0 // pred_check_branch
    %21 = sbr.rel (0) target = $region17
  $region16: #{lstm_regression_forward.1} parent=0 // pred_region
    _
  $region17: #{lstm_regression_forward.1} parent=0 // pred_fallthru
    _
  // Predicated region
  $region18: #{lstm_regression_forward.1} parent=0 // pred_check
    _
  $region19: #{lstm_regression_forward.1} parent=0 // pred_check_branch
    %23 = sbr.rel (0) target = $region21
  $region20: #{lstm_regression_forward.1} parent=0 // pred_region
    _
  $region21: #{lstm_regression_forward.1} parent=0 // pred_fallthru
    _
  // Predicated region
  $region22: #{lstm_regression_forward.1} parent=0 // pred_check
    _
  $region23: #{lstm_regression_forward.1} parent=0 // pred_check_branch
    %25 = sbr.rel (0) target = $region25
  $region24: #{lstm_regression_forward.1} parent=0 // pred_region
    _
  $region25: #{lstm_regression_forward.1} parent=0 // pred_fallthru
    _
  // Predicated region
  $region26: #{lstm_regression_forward.1} parent=0 // pred_check
    _
  $region27: #{lstm_regression_forward.1} parent=0 // pred_check_branch
    %27 = sbr.rel (0) target = $region29
  $region28: #{lstm_regression_forward.1} parent=0 // pred_region
    _
  $region29: #{lstm_regression_forward.1} parent=0 // pred_fallthru
    _
  // Predicated region
  $region30: #{lstm_regression_forward.1} parent=0 // pred_check
    _
  $region31: #{lstm_regression_forward.1} parent=0 // pred_check_branch
    %29 = sbr.rel (0) target = $region33
  $region32: #{lstm_regression_forward.1} parent=0 // pred_region
    _
  $region33: #{lstm_regression_forward.1} parent=0 // pred_fallthru
    _
  // Predicated region
  $region34: #{lstm_regression_forward.1} parent=0 // pred_check
    _
  $region35: #{lstm_regression_forward.1} parent=0 // pred_check_branch
    %31 = sbr.rel (0) target = $region37
  $region36: #{lstm_regression_forward.1} parent=0 // pred_region
    _
  $region37: #{lstm_regression_forward.1} parent=0 // pred_fallthru
    _
  %v33 = vld [vmem:[%s0] sm:$0xff]
  %v34 = vld [vmem:[%s0 + $0x8] sm:$0xff]
  %v35 = vld [vmem:[%s0 + $0x10] sm:$0xff]
  %v36 = vld [vmem:[%s0 + $0x18] sm:$0xff]
  %v37 = vld [vmem:[%s0 + $0x20] sm:$0xff]
  %v38 = vld [vmem:[%s0 + $0x28] sm:$0xff]
  %v39 = vld [vmem:[%s0 + $0x30] sm:$0xff]
  %v40 = vld [vmem:[%s0 + $0x38] sm:$0xff]
  %v41 = vld [vmem:[%s1] sm:$0x1]
  %43 = vset.pattern.permute.xlu0 0
  %44 = vperm.xlu0 %43, %v33
  %v45 = vpop.permute.xlu0 %44
  %48 = vset.pattern.permute.xlu0 0
  %49 = vperm.xlu0 %48, %v34
  %v50 = vpop.permute.xlu0 %49
  %53 = vset.pattern.permute.xlu0 0
  %54 = vperm.xlu0 %53, %v35
  %v55 = vpop.permute.xlu0 %54
  %58 = vset.pattern.permute.xlu0 0
  %59 = vperm.xlu0 %58, %v36
  %v60 = vpop.permute.xlu0 %59
  %63 = vset.pattern.permute.xlu0 0
  %64 = vperm.xlu0 %63, %v37
  %v65 = vpop.permute.xlu0 %64
  %68 = vset.pattern.permute.xlu0 0
  %69 = vperm.xlu0 %68, %v38
  %v70 = vpop.permute.xlu0 %69
  %73 = vset.pattern.permute.xlu0 0
  %74 = vperm.xlu0 %73, %v39
  %v75 = vpop.permute.xlu0 %74
  %78 = vset.pattern.permute.xlu0 0
  %79 = vperm.xlu0 %78, %v40
  %v80 = vpop.permute.xlu0 %79
  %v83 = vlaneseq
  %v84 = vshrl.u32 %v83, 7
  %v85 = vsub.s32 0, %v84
  %v86 = vrot.slane %v41, %v85
  %v88 = vmul.f32 %v45, %v86
  %v89 = vmul.f32 %v50, %v86
  %v90 = vmul.f32 %v55, %v86
  %v91 = vmul.f32 %v60, %v86
  %v92 = vmul.f32 %v65, %v86
  %v93 = vmul.f32 %v70, %v86
  %v94 = vmul.f32 %v75, %v86
  %v95 = vmul.f32 %v80, %v86
  %v96 = vld [vmem:[%s2] sm:$0x1]
  %v98 = vlaneseq
  %v99 = vshrl.u32 %v98, 7
  %v100 = vsub.s32 0, %v99
  %v101 = vrot.slane %v96, %v100
  %v103 = vadd.f32 %v88, %v101
  %v104 = vadd.f32 %v89, %v101
  %v105 = vadd.f32 %v90, %v101
  %v106 = vadd.f32 %v91, %v101
  %v107 = vadd.f32 %v92, %v101
  %v108 = vadd.f32 %v93, %v101
  %v109 = vadd.f32 %v94, %v101
  %v110 = vadd.f32 %v95, %v101
  %v111 = vld [vmem:[%s3] sm:$0xf]
  %v112 = vld [vmem:[%s3 + $0x4] sm:$0xf]
  %v113 = vld [vmem:[%s3 + $0x8] sm:$0xf]
  %v114 = vld [vmem:[%s3 + $0xc] sm:$0xf]
  %v119 = vunpack.c.l.b16 %v111
  %v120 = vunpack.c.l.b16 %v112
  %v121 = vunpack.c.l.b16 %v113
  %v122 = vunpack.c.l.b16 %v114
  %v123 = vpack.c.b16 %v120, %v119
  %v124 = vpack.c.b16 %v122, %v121
  %vm127 = vcmask 261120
  %v129 = vsel %vm127, 0, 0
  %131 = vmatprep.subr.bf16.mxu0 0
  %132 = vmatpush1.bf16.msra.mxu0 %v123
  %133 = vmatprep.subr.bf16.mxu0 0
  %134 = vmatpush1.bf16.msra.mxu0 %v124
  %135 = vmatprep.subr.bf16.mxu0 0
  %136 = vmatpush1.bf16.msra.mxu0 0
  %137 = vmatprep.subr.bf16.mxu0 0
  %138 = vmatpush1.bf16.msra.mxu0 0
  %139 = vmatprep.subr.bf16.mxu0 0
  %140 = vmatpush1.bf16.msra.mxu0 0
  %141 = vmatprep.subr.bf16.mxu0 0
  %142 = vmatpush1.bf16.msra.mxu0 0
  %143 = vmatprep.subr.bf16.mxu0 0
  %144 = vmatpush1.bf16.msra.mxu0 0
  %145 = vmatprep.subr.bf16.mxu0 0
  %146 = vmatpush1.bf16.msra.mxu0 0
  %147 = vmatprep.subr.bf16.mxu0 0
  %148 = vmatpush1.bf16.msra.mxu0 0
  %149 = vmatprep.subr.bf16.mxu0 0
  %150 = vmatpush1.bf16.msra.mxu0 0
  %151 = vmatprep.subr.bf16.mxu0 0
  %152 = vmatpush1.bf16.msra.mxu0 0
  %153 = vmatprep.subr.bf16.mxu0 0
  %154 = vmatpush1.bf16.msra.mxu0 0
  %155 = vmatprep.subr.bf16.mxu0 0
  %156 = vmatpush1.bf16.msra.mxu0 0
  %157 = vmatprep.subr.bf16.mxu0 0
  %158 = vmatpush1.bf16.msra.mxu0 0
  %159 = vmatprep.subr.bf16.mxu0 0
  %160 = vmatpush1.bf16.msra.mxu0 0
  %161 = vmatprep.subr.bf16.mxu0 0
  %162 = vmatpush1.bf16.msra.mxu0 0
  %163 = vmatprep.mubr.bf16.mxu0 0
  %164 = vmatmul.mubr.bf16.gmra.mrb[0].mxu0 %v129
  %v165 = vpop.f32.mrb[0].mxu0
  %v166 = vadd.f32 0.0, %v165
  %v167 = vpop.f32.mrb[0].mxu0
  %v168 = vpop.f32.mrb[0].mxu0
  %v169 = vpop.f32.mrb[0].mxu0
  %170 = vdwg.mxu0
  %v171 = vadd.f32 %v103, %v166
  %v172 = vmul.f32 %v171, 0.5
  %v173 = vtanh.pop %v172
  %v174 = vmul.f32 %v173, 0.5
  %v175 = vadd.f32 %v174, 0.5
  %v176 = vtanh.pop %v171
  %v177 = vmul.f32 %v175, 0.0
  %179 = vrot.lane.b32.xlu0 %v176, 64
  %v180 = vpop.permute.xlu0 %179
  %v182 = vmul.f32 %v175, %v180
  %184 = vrot.lane.b32.xlu0 %v182, 32
  %v185 = vpop.permute.xlu0 %184
  %v187 = vadd.f32 %v177, %v185
  %v188 = vtanh.pop %v187
  %190 = vrot.lane.b32.xlu0 %v188, 64
  %v191 = vpop.permute.xlu0 %190
  %v193 = vmul.f32 %v175, %v191
  %v194 = vpack.c.bf16 %v193, %v193
  %196 = vrot.lane.b32.xlu0 %v194, 32
  %v197 = vpop.permute.xlu0 %196
  %v199 = vsel %vm127, %v197, 0
  %201 = vmatprep.subr.bf16.mxu0 0
  %202 = vmatpush1.bf16.msra.mxu0 %v123
  %203 = vmatprep.subr.bf16.mxu0 0
  %204 = vmatpush1.bf16.msra.mxu0 %v124
  %205 = vmatprep.subr.bf16.mxu0 0
  %206 = vmatpush1.bf16.msra.mxu0 0
  %207 = vmatprep.subr.bf16.mxu0 0
  %208 = vmatpush1.bf16.msra.mxu0 0
  %209 = vmatprep.subr.bf16.mxu0 0
  %210 = vmatpush1.bf16.msra.mxu0 0
  %211 = vmatprep.subr.bf16.mxu0 0
  %212 = vmatpush1.bf16.msra.mxu0 0
  %213 = vmatprep.subr.bf16.mxu0 0
  %214 = vmatpush1.bf16.msra.mxu0 0
  %215 = vmatprep.subr.bf16.mxu0 0
  %216 = vmatpush1.bf16.msra.mxu0 0
  %217 = vmatprep.subr.bf16.mxu0 0
  %218 = vmatpush1.bf16.msra.mxu0 0
  %219 = vmatprep.subr.bf16.mxu0 0
  %220 = vmatpush1.bf16.msra.mxu0 0
  %221 = vmatprep.subr.bf16.mxu0 0
  %222 = vmatpush1.bf16.msra.mxu0 0
  %223 = vmatprep.subr.bf16.mxu0 0
  %224 = vmatpush1.bf16.msra.mxu0 0
  %225 = vmatprep.subr.bf16.mxu0 0
  %226 = vmatpush1.bf16.msra.mxu0 0
  %227 = vmatprep.subr.bf16.mxu0 0
  %228 = vmatpush1.bf16.msra.mxu0 0
  %229 = vmatprep.subr.bf16.mxu0 0
  %230 = vmatpush1.bf16.msra.mxu0 0
  %231 = vmatprep.subr.bf16.mxu0 0
  %232 = vmatpush1.bf16.msra.mxu0 0
  %233 = vmatprep.mubr.bf16.mxu0 0
  %234 = vmatmul.mubr.bf16.gmra.mrb[0].mxu0 %v199
  %v235 = vpop.f32.mrb[0].mxu0
  %v236 = vadd.f32 0.0, %v235
  %v237 = vpop.f32.mrb[0].mxu0
  %v238 = vpop.f32.mrb[0].mxu0
  %v239 = vpop.f32.mrb[0].mxu0
  %240 = vdwg.mxu0
  %v241 = vadd.f32 %v104, %v236
  %v242 = vmul.f32 %v241, 0.5
  %v243 = vtanh.pop %v242
  %v244 = vmul.f32 %v243, 0.5
  %v245 = vadd.f32 %v244, 0.5
  %v246 = vtanh.pop %v241
  %v247 = vmul.f32 %v245, %v187
  %249 = vrot.lane.b32.xlu0 %v246, 64
  %v250 = vpop.permute.xlu0 %249
  %v252 = vmul.f32 %v245, %v250
  %254 = vrot.lane.b32.xlu0 %v252, 32
  %v255 = vpop.permute.xlu0 %254
  %v257 = vadd.f32 %v247, %v255
  %v258 = vtanh.pop %v257
  %260 = vrot.lane.b32.xlu0 %v258, 64
  %v261 = vpop.permute.xlu0 %260
  %v263 = vmul.f32 %v245, %v261
  %v264 = vpack.c.bf16 %v263, %v263
  %266 = vrot.lane.b32.xlu0 %v264, 32
  %v267 = vpop.permute.xlu0 %266
  %v269 = vsel %vm127, %v267, 0
  %271 = vmatprep.subr.bf16.mxu0 0
  %272 = vmatpush1.bf16.msra.mxu0 %v123
  %273 = vmatprep.subr.bf16.mxu0 0
  %274 = vmatpush1.bf16.msra.mxu0 %v124
  %275 = vmatprep.subr.bf16.mxu0 0
  %276 = vmatpush1.bf16.msra.mxu0 0
  %277 = vmatprep.subr.bf16.mxu0 0
  %278 = vmatpush1.bf16.msra.mxu0 0
  %279 = vmatprep.subr.bf16.mxu0 0
  %280 = vmatpush1.bf16.msra.mxu0 0
  %281 = vmatprep.subr.bf16.mxu0 0
  %282 = vmatpush1.bf16.msra.mxu0 0
  %283 = vmatprep.subr.bf16.mxu0 0
  %284 = vmatpush1.bf16.msra.mxu0 0
  %285 = vmatprep.subr.bf16.mxu0 0
  %286 = vmatpush1.bf16.msra.mxu0 0
  %287 = vmatprep.subr.bf16.mxu0 0
  %288 = vmatpush1.bf16.msra.mxu0 0
  %289 = vmatprep.subr.bf16.mxu0 0
  %290 = vmatpush1.bf16.msra.mxu0 0
  %291 = vmatprep.subr.bf16.mxu0 0
  %292 = vmatpush1.bf16.msra.mxu0 0
  %293 = vmatprep.subr.bf16.mxu0 0
  %294 = vmatpush1.bf16.msra.mxu0 0
  %295 = vmatprep.subr.bf16.mxu0 0
  %296 = vmatpush1.bf16.msra.mxu0 0
  %297 = vmatprep.subr.bf16.mxu0 0
  %298 = vmatpush1.bf16.msra.mxu0 0
  %299 = vmatprep.subr.bf16.mxu0 0
  %300 = vmatpush1.bf16.msra.mxu0 0
  %301 = vmatprep.subr.bf16.mxu0 0
  %302 = vmatpush1.bf16.msra.mxu0 0
  %303 = vmatprep.mubr.bf16.mxu0 0
  %304 = vmatmul.mubr.bf16.gmra.mrb[0].mxu0 %v269
  %v305 = vpop.f32.mrb[0].mxu0
  %v306 = vadd.f32 0.0, %v305
  %v307 = vpop.f32.mrb[0].mxu0
  %v308 = vpop.f32.mrb[0].mxu0
  %v309 = vpop.f32.mrb[0].mxu0
  %310 = vdwg.mxu0
  %v311 = vadd.f32 %v105, %v306
  %v312 = vmul.f32 %v311, 0.5
  %v313 = vtanh.pop %v312
  %v314 = vmul.f32 %v313, 0.5
  %v315 = vadd.f32 %v314, 0.5
  %v316 = vtanh.pop %v311
  %v317 = vmul.f32 %v315, %v257
  %319 = vrot.lane.b32.xlu0 %v316, 64
  %v320 = vpop.permute.xlu0 %319
  %v322 = vmul.f32 %v315, %v320
  %324 = vrot.lane.b32.xlu0 %v322, 32
  %v325 = vpop.permute.xlu0 %324
  %v327 = vadd.f32 %v317, %v325
  %v328 = vtanh.pop %v327
  %330 = vrot.lane.b32.xlu0 %v328, 64
  %v331 = vpop.permute.xlu0 %330
  %v333 = vmul.f32 %v315, %v331
  %v334 = vpack.c.bf16 %v333, %v333
  %336 = vrot.lane.b32.xlu0 %v334, 32
  %v337 = vpop.permute.xlu0 %336
  %v339 = vsel %vm127, %v337, 0
  %341 = vmatprep.subr.bf16.mxu0 0
  %342 = vmatpush1.bf16.msra.mxu0 %v123
  %343 = vmatprep.subr.bf16.mxu0 0
  %344 = vmatpush1.bf16.msra.mxu0 %v124
  %345 = vmatprep.subr.bf16.mxu0 0
  %346 = vmatpush1.bf16.msra.mxu0 0
  %347 = vmatprep.subr.bf16.mxu0 0
  %348 = vmatpush1.bf16.msra.mxu0 0
  %349 = vmatprep.subr.bf16.mxu0 0
  %350 = vmatpush1.bf16.msra.mxu0 0
  %351 = vmatprep.subr.bf16.mxu0 0
  %352 = vmatpush1.bf16.msra.mxu0 0
  %353 = vmatprep.subr.bf16.mxu0 0
  %354 = vmatpush1.bf16.msra.mxu0 0
  %355 = vmatprep.subr.bf16.mxu0 0
  %356 = vmatpush1.bf16.msra.mxu0 0
  %357 = vmatprep.subr.bf16.mxu0 0
  %358 = vmatpush1.bf16.msra.mxu0 0
  %359 = vmatprep.subr.bf16.mxu0 0
  %360 = vmatpush1.bf16.msra.mxu0 0
  %361 = vmatprep.subr.bf16.mxu0 0
  %362 = vmatpush1.bf16.msra.mxu0 0
  %363 = vmatprep.subr.bf16.mxu0 0
  %364 = vmatpush1.bf16.msra.mxu0 0
  %365 = vmatprep.subr.bf16.mxu0 0
  %366 = vmatpush1.bf16.msra.mxu0 0
  %367 = vmatprep.subr.bf16.mxu0 0
  %368 = vmatpush1.bf16.msra.mxu0 0
  %369 = vmatprep.subr.bf16.mxu0 0
  %370 = vmatpush1.bf16.msra.mxu0 0
  %371 = vmatprep.subr.bf16.mxu0 0
  %372 = vmatpush1.bf16.msra.mxu0 0
  %373 = vmatprep.mubr.bf16.mxu0 0
  %374 = vmatmul.mubr.bf16.gmra.mrb[0].mxu0 %v339
  %v375 = vpop.f32.mrb[0].mxu0
  %v376 = vadd.f32 0.0, %v375
  %v377 = vpop.f32.mrb[0].mxu0
  %v378 = vpop.f32.mrb[0].mxu0
  %v379 = vpop.f32.mrb[0].mxu0
  %380 = vdwg.mxu0
  %v381 = vadd.f32 %v106, %v376
  %v382 = vmul.f32 %v381, 0.5
  %v383 = vtanh.pop %v382
  %v384 = vmul.f32 %v383, 0.5
  %v385 = vadd.f32 %v384, 0.5
  %v386 = vtanh.pop %v381
  %v387 = vmul.f32 %v385, %v327
  %389 = vrot.lane.b32.xlu0 %v386, 64
  %v390 = vpop.permute.xlu0 %389
  %v392 = vmul.f32 %v385, %v390
  %394 = vrot.lane.b32.xlu0 %v392, 32
  %v395 = vpop.permute.xlu0 %394
  %v397 = vadd.f32 %v387, %v395
  %v398 = vtanh.pop %v397
  %400 = vrot.lane.b32.xlu0 %v398, 64
  %v401 = vpop.permute.xlu0 %400
  %v403 = vmul.f32 %v385, %v401
  %v404 = vpack.c.bf16 %v403, %v403
  %406 = vrot.lane.b32.xlu0 %v404, 32
  %v407 = vpop.permute.xlu0 %406
  %v409 = vsel %vm127, %v407, 0
  %411 = vmatprep.subr.bf16.mxu0 0
  %412 = vmatpush1.bf16.msra.mxu0 %v123
  %413 = vmatprep.subr.bf16.mxu0 0
  %414 = vmatpush1.bf16.msra.mxu0 %v124
  %415 = vmatprep.subr.bf16.mxu0 0
  %416 = vmatpush1.bf16.msra.mxu0 0
  %417 = vmatprep.subr.bf16.mxu0 0
  %418 = vmatpush1.bf16.msra.mxu0 0
  %419 = vmatprep.subr.bf16.mxu0 0
  %420 = vmatpush1.bf16.msra.mxu0 0
  %421 = vmatprep.subr.bf16.mxu0 0
  %422 = vmatpush1.bf16.msra.mxu0 0
  %423 = vmatprep.subr.bf16.mxu0 0
  %424 = vmatpush1.bf16.msra.mxu0 0
  %425 = vmatprep.subr.bf16.mxu0 0
  %426 = vmatpush1.bf16.msra.mxu0 0
  %427 = vmatprep.subr.bf16.mxu0 0
  %428 = vmatpush1.bf16.msra.mxu0 0
  %429 = vmatprep.subr.bf16.mxu0 0
  %430 = vmatpush1.bf16.msra.mxu0 0
  %431 = vmatprep.subr.bf16.mxu0 0
  %432 = vmatpush1.bf16.msra.mxu0 0
  %433 = vmatprep.subr.bf16.mxu0 0
  %434 = vmatpush1.bf16.msra.mxu0 0
  %435 = vmatprep.subr.bf16.mxu0 0
  %436 = vmatpush1.bf16.msra.mxu0 0
  %437 = vmatprep.subr.bf16.mxu0 0
  %438 = vmatpush1.bf16.msra.mxu0 0
  %439 = vmatprep.subr.bf16.mxu0 0
  %440 = vmatpush1.bf16.msra.mxu0 0
  %441 = vmatprep.subr.bf16.mxu0 0
  %442 = vmatpush1.bf16.msra.mxu0 0
  %443 = vmatprep.mubr.bf16.mxu0 0
  %444 = vmatmul.mubr.bf16.gmra.mrb[0].mxu0 %v409
  %v445 = vpop.f32.mrb[0].mxu0
  %v446 = vadd.f32 0.0, %v445
  %v447 = vpop.f32.mrb[0].mxu0
  %v448 = vpop.f32.mrb[0].mxu0
  %v449 = vpop.f32.mrb[0].mxu0
  %450 = vdwg.mxu0
  %v451 = vadd.f32 %v107, %v446
  %v452 = vmul.f32 %v451, 0.5
  %v453 = vtanh.pop %v452
  %v454 = vmul.f32 %v453, 0.5
  %v455 = vadd.f32 %v454, 0.5
  %v456 = vtanh.pop %v451
  %v457 = vmul.f32 %v455, %v397
  %459 = vrot.lane.b32.xlu0 %v456, 64
  %v460 = vpop.permute.xlu0 %459
  %v462 = vmul.f32 %v455, %v460
  %464 = vrot.lane.b32.xlu0 %v462, 32
  %v465 = vpop.permute.xlu0 %464
  %v467 = vadd.f32 %v457, %v465
  %v468 = vtanh.pop %v467
  %470 = vrot.lane.b32.xlu0 %v468, 64
  %v471 = vpop.permute.xlu0 %470
  %v473 = vmul.f32 %v455, %v471
  %v474 = vpack.c.bf16 %v473, %v473
  %476 = vrot.lane.b32.xlu0 %v474, 32
  %v477 = vpop.permute.xlu0 %476
  %v479 = vsel %vm127, %v477, 0
  %481 = vmatprep.subr.bf16.mxu0 0
  %482 = vmatpush1.bf16.msra.mxu0 %v123
  %483 = vmatprep.subr.bf16.mxu0 0
  %484 = vmatpush1.bf16.msra.mxu0 %v124
  %485 = vmatprep.subr.bf16.mxu0 0
  %486 = vmatpush1.bf16.msra.mxu0 0
  %487 = vmatprep.subr.bf16.mxu0 0
  %488 = vmatpush1.bf16.msra.mxu0 0
  %489 = vmatprep.subr.bf16.mxu0 0
  %490 = vmatpush1.bf16.msra.mxu0 0
  %491 = vmatprep.subr.bf16.mxu0 0
  %492 = vmatpush1.bf16.msra.mxu0 0
  %493 = vmatprep.subr.bf16.mxu0 0
  %494 = vmatpush1.bf16.msra.mxu0 0
  %495 = vmatprep.subr.bf16.mxu0 0
  %496 = vmatpush1.bf16.msra.mxu0 0
  %497 = vmatprep.subr.bf16.mxu0 0
  %498 = vmatpush1.bf16.msra.mxu0 0
  %499 = vmatprep.subr.bf16.mxu0 0
  %500 = vmatpush1.bf16.msra.mxu0 0
  %501 = vmatprep.subr.bf16.mxu0 0
  %502 = vmatpush1.bf16.msra.mxu0 0
  %503 = vmatprep.subr.bf16.mxu0 0
  %504 = vmatpush1.bf16.msra.mxu0 0
  %505 = vmatprep.subr.bf16.mxu0 0
  %506 = vmatpush1.bf16.msra.mxu0 0
  %507 = vmatprep.subr.bf16.mxu0 0
  %508 = vmatpush1.bf16.msra.mxu0 0
  %509 = vmatprep.subr.bf16.mxu0 0
  %510 = vmatpush1.bf16.msra.mxu0 0
  %511 = vmatprep.subr.bf16.mxu0 0
  %512 = vmatpush1.bf16.msra.mxu0 0
  %513 = vmatprep.mubr.bf16.mxu0 0
  %514 = vmatmul.mubr.bf16.gmra.mrb[0].mxu0 %v479
  %v515 = vpop.f32.mrb[0].mxu0
  %v516 = vadd.f32 0.0, %v515
  %v517 = vpop.f32.mrb[0].mxu0
  %v518 = vpop.f32.mrb[0].mxu0
  %v519 = vpop.f32.mrb[0].mxu0
  %520 = vdwg.mxu0
  %v521 = vadd.f32 %v108, %v516
  %v522 = vmul.f32 %v521, 0.5
  %v523 = vtanh.pop %v522
  %v524 = vmul.f32 %v523, 0.5
  %v525 = vadd.f32 %v524, 0.5
  %v526 = vtanh.pop %v521
  %v527 = vmul.f32 %v525, %v467
  %529 = vrot.lane.b32.xlu0 %v526, 64
  %v530 = vpop.permute.xlu0 %529
  %v532 = vmul.f32 %v525, %v530
  %534 = vrot.lane.b32.xlu0 %v532, 32
  %v535 = vpop.permute.xlu0 %534
  %v537 = vadd.f32 %v527, %v535
  %v538 = vtanh.pop %v537
  %540 = vrot.lane.b32.xlu0 %v538, 64
  %v541 = vpop.permute.xlu0 %540
  %v543 = vmul.f32 %v525, %v541
  %v544 = vpack.c.bf16 %v543, %v543
  %546 = vrot.lane.b32.xlu0 %v544, 32
  %v547 = vpop.permute.xlu0 %546
  %v549 = vsel %vm127, %v547, 0
  %551 = vmatprep.subr.bf16.mxu0 0
  %552 = vmatpush1.bf16.msra.mxu0 %v123
  %553 = vmatprep.subr.bf16.mxu0 0
  %554 = vmatpush1.bf16.msra.mxu0 %v124
  %555 = vmatprep.subr.bf16.mxu0 0
  %556 = vmatpush1.bf16.msra.mxu0 0
  %557 = vmatprep.subr.bf16.mxu0 0
  %558 = vmatpush1.bf16.msra.mxu0 0
  %559 = vmatprep.subr.bf16.mxu0 0
  %560 = vmatpush1.bf16.msra.mxu0 0
  %561 = vmatprep.subr.bf16.mxu0 0
  %562 = vmatpush1.bf16.msra.mxu0 0
  %563 = vmatprep.subr.bf16.mxu0 0
  %564 = vmatpush1.bf16.msra.mxu0 0
  %565 = vmatprep.subr.bf16.mxu0 0
  %566 = vmatpush1.bf16.msra.mxu0 0
  %567 = vmatprep.subr.bf16.mxu0 0
  %568 = vmatpush1.bf16.msra.mxu0 0
  %569 = vmatprep.subr.bf16.mxu0 0
  %570 = vmatpush1.bf16.msra.mxu0 0
  %571 = vmatprep.subr.bf16.mxu0 0
  %572 = vmatpush1.bf16.msra.mxu0 0
  %573 = vmatprep.subr.bf16.mxu0 0
  %574 = vmatpush1.bf16.msra.mxu0 0
  %575 = vmatprep.subr.bf16.mxu0 0
  %576 = vmatpush1.bf16.msra.mxu0 0
  %577 = vmatprep.subr.bf16.mxu0 0
  %578 = vmatpush1.bf16.msra.mxu0 0
  %579 = vmatprep.subr.bf16.mxu0 0
  %580 = vmatpush1.bf16.msra.mxu0 0
  %581 = vmatprep.subr.bf16.mxu0 0
  %582 = vmatpush1.bf16.msra.mxu0 0
  %583 = vmatprep.mubr.bf16.mxu0 0
  %584 = vmatmul.mubr.bf16.gmra.mrb[0].mxu0 %v549
  %v585 = vpop.f32.mrb[0].mxu0
  %v586 = vadd.f32 0.0, %v585
  %v587 = vpop.f32.mrb[0].mxu0
  %v588 = vpop.f32.mrb[0].mxu0
  %v589 = vpop.f32.mrb[0].mxu0
  %590 = vdwg.mxu0
  %v591 = vadd.f32 %v109, %v586
  %v592 = vmul.f32 %v591, 0.5
  %v593 = vtanh.pop %v592
  %v594 = vmul.f32 %v593, 0.5
  %v595 = vadd.f32 %v594, 0.5
  %v596 = vtanh.pop %v591
  %v597 = vmul.f32 %v595, %v537
  %599 = vrot.lane.b32.xlu0 %v596, 64
  %v600 = vpop.permute.xlu0 %599
  %v602 = vmul.f32 %v595, %v600
  %604 = vrot.lane.b32.xlu0 %v602, 32
  %v605 = vpop.permute.xlu0 %604
  %v607 = vadd.f32 %v597, %v605
  %v608 = vtanh.pop %v607
  %610 = vrot.lane.b32.xlu0 %v608, 64
  %v611 = vpop.permute.xlu0 %610
  %v613 = vmul.f32 %v595, %v611
  %v614 = vpack.c.bf16 %v613, %v613
  %616 = vrot.lane.b32.xlu0 %v614, 32
  %v617 = vpop.permute.xlu0 %616
  %v619 = vsel %vm127, %v617, 0
  %621 = vmatprep.subr.bf16.mxu0 0
  %622 = vmatpush1.bf16.msra.mxu0 %v123
  %623 = vmatprep.subr.bf16.mxu0 0
  %624 = vmatpush1.bf16.msra.mxu0 %v124
  %625 = vmatprep.subr.bf16.mxu0 0
  %626 = vmatpush1.bf16.msra.mxu0 0
  %627 = vmatprep.subr.bf16.mxu0 0
  %628 = vmatpush1.bf16.msra.mxu0 0
  %629 = vmatprep.subr.bf16.mxu0 0
  %630 = vmatpush1.bf16.msra.mxu0 0
  %631 = vmatprep.subr.bf16.mxu0 0
  %632 = vmatpush1.bf16.msra.mxu0 0
  %633 = vmatprep.subr.bf16.mxu0 0
  %634 = vmatpush1.bf16.msra.mxu0 0
  %635 = vmatprep.subr.bf16.mxu0 0
  %636 = vmatpush1.bf16.msra.mxu0 0
  %637 = vmatprep.subr.bf16.mxu0 0
  %638 = vmatpush1.bf16.msra.mxu0 0
  %639 = vmatprep.subr.bf16.mxu0 0
  %640 = vmatpush1.bf16.msra.mxu0 0
  %641 = vmatprep.subr.bf16.mxu0 0
  %642 = vmatpush1.bf16.msra.mxu0 0
  %643 = vmatprep.subr.bf16.mxu0 0
  %644 = vmatpush1.bf16.msra.mxu0 0
  %645 = vmatprep.subr.bf16.mxu0 0
  %646 = vmatpush1.bf16.msra.mxu0 0
  %647 = vmatprep.subr.bf16.mxu0 0
  %648 = vmatpush1.bf16.msra.mxu0 0
  %649 = vmatprep.subr.bf16.mxu0 0
  %650 = vmatpush1.bf16.msra.mxu0 0
  %651 = vmatprep.subr.bf16.mxu0 0
  %652 = vmatpush1.bf16.msra.mxu0 0
  %653 = vmatprep.mubr.bf16.mxu0 0
  %654 = vmatmul.mubr.bf16.gmra.mrb[0].mxu0 %v619
  %v655 = vpop.f32.mrb[0].mxu0
  %v656 = vadd.f32 0.0, %v655
  %v657 = vpop.f32.mrb[0].mxu0
  %v658 = vpop.f32.mrb[0].mxu0
  %v659 = vpop.f32.mrb[0].mxu0
  %660 = vdwg.mxu0
  %v661 = vadd.f32 %v110, %v656
  %v662 = vmul.f32 %v661, 0.5
  %v663 = vtanh.pop %v662
  %v664 = vmul.f32 %v663, 0.5
  %v665 = vadd.f32 %v664, 0.5
  %v666 = vtanh.pop %v661
  %v667 = vmul.f32 %v665, %v607
  %669 = vrot.lane.b32.xlu0 %v666, 64
  %v670 = vpop.permute.xlu0 %669
  %v672 = vmul.f32 %v665, %v670
  %674 = vrot.lane.b32.xlu0 %v672, 32
  %v675 = vpop.permute.xlu0 %674
  %v677 = vadd.f32 %v667, %v675
  %v678 = vtanh.pop %v677
  %680 = vrot.lane.b32.xlu0 %v678, 64
  %v681 = vpop.permute.xlu0 %680
  %v683 = vmul.f32 %v665, %v681
  %v684 = vpack.c.bf16 %v263, %v193
  %v685 = vpack.c.bf16 %v403, %v333
  %v686 = vpack.c.bf16 %v543, %v473
  %v687 = vpack.c.bf16 %v683, %v613
  %v688 = vld [vmem:[%s4] sm:$0xf]
  %v689 = vld [vmem:[%s4 + $0x4] sm:$0xf]
  %v690 = vld [vmem:[%s4 + $0x8] sm:$0xf]
  %v691 = vld [vmem:[%s4 + $0xc] sm:$0xf]
  %v692 = vld [vmem:[%s5] sm:$0x1]
  %v694 = vlaneseq
  %v695 = vshrl.u32 %v694, 7
  %v696 = vsub.s32 0, %v695
  %v697 = vrot.slane %v692, %v696
  %703 = vrot.lane.b32.xlu0 %v684, 32
  %v704 = vpop.permute.xlu0 %703
  %705 = vrot.lane.b32.xlu0 %v685, 32
  %v706 = vpop.permute.xlu0 %705
  %707 = vrot.lane.b32.xlu0 %v686, 32
  %v708 = vpop.permute.xlu0 %707
  %709 = vrot.lane.b32.xlu0 %v687, 32
  %v710 = vpop.permute.xlu0 %709
  %v715 = vunpack.c.l.b16 %v688
  %v716 = vunpack.c.l.b16 %v689
  %v717 = vunpack.c.l.b16 %v690
  %v718 = vunpack.c.l.b16 %v691
  %v719 = vpack.c.b16 %v716, %v715
  %v720 = vpack.c.b16 %v718, %v717
  %v724 = vsel %vm127, %v704, 0
  %v727 = vsel %vm127, %v706, 0
  %v730 = vsel %vm127, %v708, 0
  %v733 = vsel %vm127, %v710, 0
  %735 = vmatprep.subr.bf16.mxu0 0
  %736 = vmatpush1.bf16.msra.mxu0 %v719
  %737 = vmatprep.subr.bf16.mxu0 0
  %738 = vmatpush1.bf16.msra.mxu0 %v720
  %739 = vmatprep.subr.bf16.mxu0 0
  %740 = vmatpush1.bf16.msra.mxu0 0
  %741 = vmatprep.subr.bf16.mxu0 0
  %742 = vmatpush1.bf16.msra.mxu0 0
  %743 = vmatprep.subr.bf16.mxu0 0
  %744 = vmatpush1.bf16.msra.mxu0 0
  %745 = vmatprep.subr.bf16.mxu0 0
  %746 = vmatpush1.bf16.msra.mxu0 0
  %747 = vmatprep.subr.bf16.mxu0 0
  %748 = vmatpush1.bf16.msra.mxu0 0
  %749 = vmatprep.subr.bf16.mxu0 0
  %750 = vmatpush1.bf16.msra.mxu0 0
  %751 = vmatprep.subr.bf16.mxu0 0
  %752 = vmatpush1.bf16.msra.mxu0 0
  %753 = vmatprep.subr.bf16.mxu0 0
  %754 = vmatpush1.bf16.msra.mxu0 0
  %755 = vmatprep.subr.bf16.mxu0 0
  %756 = vmatpush1.bf16.msra.mxu0 0
  %757 = vmatprep.subr.bf16.mxu0 0
  %758 = vmatpush1.bf16.msra.mxu0 0
  %759 = vmatprep.subr.bf16.mxu0 0
  %760 = vmatpush1.bf16.msra.mxu0 0
  %761 = vmatprep.subr.bf16.mxu0 0
  %762 = vmatpush1.bf16.msra.mxu0 0
  %763 = vmatprep.subr.bf16.mxu0 0
  %764 = vmatpush1.bf16.msra.mxu0 0
  %765 = vmatprep.subr.bf16.mxu0 0
  %766 = vmatpush1.bf16.msra.mxu0 0
  %767 = vmatprep.mubr.bf16.mxu0 0
  %768 = vmatmul.mubr.bf16.gmra.mrb[0].mxu0 %v724
  %v769 = vpop.f32.mrb[0].mxu0
  %v770 = vadd.f32 %v697, %v769
  %v771 = vpop.f32.mrb[0].mxu0
  %v772 = vpop.f32.mrb[0].mxu0
  %v773 = vadd.f32 %v697, %v772
  %v774 = vpop.f32.mrb[0].mxu0
  %775 = vmatprep.mubr.bf16.mxu0 0
  %776 = vmatmul.mubr.bf16.gmra.mrb[0].mxu0 %v727
  %v777 = vpop.f32.mrb[0].mxu0
  %v778 = vadd.f32 %v697, %v777
  %v779 = vpop.f32.mrb[0].mxu0
  %v780 = vpop.f32.mrb[0].mxu0
  %v781 = vadd.f32 %v697, %v780
  %v782 = vpop.f32.mrb[0].mxu0
  %783 = vmatprep.mubr.bf16.mxu0 0
  %784 = vmatmul.mubr.bf16.gmra.mrb[0].mxu0 %v730
  %v785 = vpop.f32.mrb[0].mxu0
  %v786 = vadd.f32 %v697, %v785
  %v787 = vpop.f32.mrb[0].mxu0
  %v788 = vpop.f32.mrb[0].mxu0
  %v789 = vadd.f32 %v697, %v788
  %v790 = vpop.f32.mrb[0].mxu0
  %791 = vmatprep.mubr.bf16.mxu0 0
  %792 = vmatmul.mubr.bf16.gmra.mrb[0].mxu0 %v733
  %v793 = vpop.f32.mrb[0].mxu0
  %v794 = vadd.f32 %v697, %v793
  %v795 = vpop.f32.mrb[0].mxu0
  %v796 = vpop.f32.mrb[0].mxu0
  %v797 = vadd.f32 %v697, %v796
  %v798 = vpop.f32.mrb[0].mxu0
  %799 = vdwg.mxu0
  %v800 = vld [vmem:[%s6] sm:$0xf]
  %v801 = vld [vmem:[%s6 + $0x4] sm:$0xf]
  %v802 = vld [vmem:[%s6 + $0x8] sm:$0xf]
  %v803 = vld [vmem:[%s6 + $0xc] sm:$0xf]
  %v808 = vunpack.c.l.b16 %v800
  %v809 = vunpack.c.l.b16 %v801
  %v810 = vunpack.c.l.b16 %v802
  %v811 = vunpack.c.l.b16 %v803
  %v812 = vpack.c.b16 %v809, %v808
  %v813 = vpack.c.b16 %v811, %v810
  %816 = vmatprep.subr.bf16.mxu0 0
  %817 = vmatpush1.bf16.msra.mxu0 %v812
  %818 = vmatprep.subr.bf16.mxu0 0
  %819 = vmatpush1.bf16.msra.mxu0 %v813
  %820 = vmatprep.subr.bf16.mxu0 0
  %821 = vmatpush1.bf16.msra.mxu0 0
  %822 = vmatprep.subr.bf16.mxu0 0
  %823 = vmatpush1.bf16.msra.mxu0 0
  %824 = vmatprep.subr.bf16.mxu0 0
  %825 = vmatpush1.bf16.msra.mxu0 0
  %826 = vmatprep.subr.bf16.mxu0 0
  %827 = vmatpush1.bf16.msra.mxu0 0
  %828 = vmatprep.subr.bf16.mxu0 0
  %829 = vmatpush1.bf16.msra.mxu0 0
  %830 = vmatprep.subr.bf16.mxu0 0
  %831 = vmatpush1.bf16.msra.mxu0 0
  %832 = vmatprep.subr.bf16.mxu0 0
  %833 = vmatpush1.bf16.msra.mxu0 0
  %834 = vmatprep.subr.bf16.mxu0 0
  %835 = vmatpush1.bf16.msra.mxu0 0
  %836 = vmatprep.subr.bf16.mxu0 0
  %837 = vmatpush1.bf16.msra.mxu0 0
  %838 = vmatprep.subr.bf16.mxu0 0
  %839 = vmatpush1.bf16.msra.mxu0 0
  %840 = vmatprep.subr.bf16.mxu0 0
  %841 = vmatpush1.bf16.msra.mxu0 0
  %842 = vmatprep.subr.bf16.mxu0 0
  %843 = vmatpush1.bf16.msra.mxu0 0
  %844 = vmatprep.subr.bf16.mxu0 0
  %845 = vmatpush1.bf16.msra.mxu0 0
  %846 = vmatprep.subr.bf16.mxu0 0
  %847 = vmatpush1.bf16.msra.mxu0 0
  %848 = vmatprep.mubr.bf16.mxu0 0
  %849 = vmatmul.mubr.bf16.gmra.mrb[0].mxu0 %v129
  %v850 = vpop.f32.mrb[0].mxu0
  %v851 = vadd.f32 0.0, %v850
  %v852 = vpop.f32.mrb[0].mxu0
  %v853 = vpop.f32.mrb[0].mxu0
  %v854 = vpop.f32.mrb[0].mxu0
  %855 = vdwg.mxu0
  %v856 = vadd.f32 %v770, %v851
  %v857 = vmul.f32 %v856, 0.5
  %v858 = vtanh.pop %v857
  %v859 = vmul.f32 %v858, 0.5
  %v860 = vadd.f32 %v859, 0.5
  %v861 = vtanh.pop %v856
  %v862 = vmul.f32 %v860, 0.0
  %864 = vrot.lane.b32.xlu0 %v861, 64
  %v865 = vpop.permute.xlu0 %864
  %v867 = vmul.f32 %v860, %v865
  %869 = vrot.lane.b32.xlu0 %v867, 32
  %v870 = vpop.permute.xlu0 %869
  %v872 = vadd.f32 %v862, %v870
  %v873 = vtanh.pop %v872
  %875 = vrot.lane.b32.xlu0 %v873, 64
  %v876 = vpop.permute.xlu0 %875
  %v878 = vmul.f32 %v860, %v876
  %v879 = vpack.c.bf16 %v878, %v878
  %881 = vrot.lane.b32.xlu0 %v879, 32
  %v882 = vpop.permute.xlu0 %881
  %v884 = vsel %vm127, %v882, 0
  %886 = vmatprep.subr.bf16.mxu0 0
  %887 = vmatpush1.bf16.msra.mxu0 %v812
  %888 = vmatprep.subr.bf16.mxu0 0
  %889 = vmatpush1.bf16.msra.mxu0 %v813
  %890 = vmatprep.subr.bf16.mxu0 0
  %891 = vmatpush1.bf16.msra.mxu0 0
  %892 = vmatprep.subr.bf16.mxu0 0
  %893 = vmatpush1.bf16.msra.mxu0 0
  %894 = vmatprep.subr.bf16.mxu0 0
  %895 = vmatpush1.bf16.msra.mxu0 0
  %896 = vmatprep.subr.bf16.mxu0 0
  %897 = vmatpush1.bf16.msra.mxu0 0
  %898 = vmatprep.subr.bf16.mxu0 0
  %899 = vmatpush1.bf16.msra.mxu0 0
  %900 = vmatprep.subr.bf16.mxu0 0
  %901 = vmatpush1.bf16.msra.mxu0 0
  %902 = vmatprep.subr.bf16.mxu0 0
  %903 = vmatpush1.bf16.msra.mxu0 0
  %904 = vmatprep.subr.bf16.mxu0 0
  %905 = vmatpush1.bf16.msra.mxu0 0
  %906 = vmatprep.subr.bf16.mxu0 0
  %907 = vmatpush1.bf16.msra.mxu0 0
  %908 = vmatprep.subr.bf16.mxu0 0
  %909 = vmatpush1.bf16.msra.mxu0 0
  %910 = vmatprep.subr.bf16.mxu0 0
  %911 = vmatpush1.bf16.msra.mxu0 0
  %912 = vmatprep.subr.bf16.mxu0 0
  %913 = vmatpush1.bf16.msra.mxu0 0
  %914 = vmatprep.subr.bf16.mxu0 0
  %915 = vmatpush1.bf16.msra.mxu0 0
  %916 = vmatprep.subr.bf16.mxu0 0
  %917 = vmatpush1.bf16.msra.mxu0 0
  %918 = vmatprep.mubr.bf16.mxu0 0
  %919 = vmatmul.mubr.bf16.gmra.mrb[0].mxu0 %v884
  %v920 = vpop.f32.mrb[0].mxu0
  %v921 = vadd.f32 0.0, %v920
  %v922 = vpop.f32.mrb[0].mxu0
  %v923 = vpop.f32.mrb[0].mxu0
  %v924 = vpop.f32.mrb[0].mxu0
  %925 = vdwg.mxu0
  %v926 = vadd.f32 %v773, %v921
  %v927 = vmul.f32 %v926, 0.5
  %v928 = vtanh.pop %v927
  %v929 = vmul.f32 %v928, 0.5
  %v930 = vadd.f32 %v929, 0.5
  %v931 = vtanh.pop %v926
  %v932 = vmul.f32 %v930, %v872
  %934 = vrot.lane.b32.xlu0 %v931, 64
  %v935 = vpop.permute.xlu0 %934
  %v937 = vmul.f32 %v930, %v935
  %939 = vrot.lane.b32.xlu0 %v937, 32
  %v940 = vpop.permute.xlu0 %939
  %v942 = vadd.f32 %v932, %v940
  %v943 = vtanh.pop %v942
  %945 = vrot.lane.b32.xlu0 %v943, 64
  %v946 = vpop.permute.xlu0 %945
  %v948 = vmul.f32 %v930, %v946
  %v949 = vpack.c.bf16 %v948, %v948
  %951 = vrot.lane.b32.xlu0 %v949, 32
  %v952 = vpop.permute.xlu0 %951
  %v954 = vsel %vm127, %v952, 0
  %956 = vmatprep.subr.bf16.mxu0 0
  %957 = vmatpush1.bf16.msra.mxu0 %v812
  %958 = vmatprep.subr.bf16.mxu0 0
  %959 = vmatpush1.bf16.msra.mxu0 %v813
  %960 = vmatprep.subr.bf16.mxu0 0
  %961 = vmatpush1.bf16.msra.mxu0 0
  %962 = vmatprep.subr.bf16.mxu0 0
  %963 = vmatpush1.bf16.msra.mxu0 0
  %964 = vmatprep.subr.bf16.mxu0 0
  %965 = vmatpush1.bf16.msra.mxu0 0
  %966 = vmatprep.subr.bf16.mxu0 0
  %967 = vmatpush1.bf16.msra.mxu0 0
  %968 = vmatprep.subr.bf16.mxu0 0
  %969 = vmatpush1.bf16.msra.mxu0 0
  %970 = vmatprep.subr.bf16.mxu0 0
  %971 = vmatpush1.bf16.msra.mxu0 0
  %972 = vmatprep.subr.bf16.mxu0 0
  %973 = vmatpush1.bf16.msra.mxu0 0
  %974 = vmatprep.subr.bf16.mxu0 0
  %975 = vmatpush1.bf16.msra.mxu0 0
  %976 = vmatprep.subr.bf16.mxu0 0
  %977 = vmatpush1.bf16.msra.mxu0 0
  %978 = vmatprep.subr.bf16.mxu0 0
  %979 = vmatpush1.bf16.msra.mxu0 0
  %980 = vmatprep.subr.bf16.mxu0 0
  %981 = vmatpush1.bf16.msra.mxu0 0
  %982 = vmatprep.subr.bf16.mxu0 0
  %983 = vmatpush1.bf16.msra.mxu0 0
  %984 = vmatprep.subr.bf16.mxu0 0
  %985 = vmatpush1.bf16.msra.mxu0 0
  %986 = vmatprep.subr.bf16.mxu0 0
  %987 = vmatpush1.bf16.msra.mxu0 0
  %988 = vmatprep.mubr.bf16.mxu0 0
  %989 = vmatmul.mubr.bf16.gmra.mrb[0].mxu0 %v954
  %v990 = vpop.f32.mrb[0].mxu0
  %v991 = vadd.f32 0.0, %v990
  %v992 = vpop.f32.mrb[0].mxu0
  %v993 = vpop.f32.mrb[0].mxu0
  %v994 = vpop.f32.mrb[0].mxu0
  %995 = vdwg.mxu0
  %v996 = vadd.f32 %v778, %v991
  %v997 = vmul.f32 %v996, 0.5
  %v998 = vtanh.pop %v997
  %v999 = vmul.f32 %v998, 0.5
  %v1000 = vadd.f32 %v999, 0.5
  %v1001 = vtanh.pop %v996
  %v1002 = vmul.f32 %v1000, %v942
  %1004 = vrot.lane.b32.xlu0 %v1001, 64
  %v1005 = vpop.permute.xlu0 %1004
  %v1007 = vmul.f32 %v1000, %v1005
  %1009 = vrot.lane.b32.xlu0 %v1007, 32
  %v1010 = vpop.permute.xlu0 %1009
  %v1012 = vadd.f32 %v1002, %v1010
  %v1013 = vtanh.pop %v1012
  %1015 = vrot.lane.b32.xlu0 %v1013, 64
  %v1016 = vpop.permute.xlu0 %1015
  %v1018 = vmul.f32 %v1000, %v1016
  %v1019 = vpack.c.bf16 %v1018, %v1018
  %1021 = vrot.lane.b32.xlu0 %v1019, 32
  %v1022 = vpop.permute.xlu0 %1021
  %v1024 = vsel %vm127, %v1022, 0
  %1026 = vmatprep.subr.bf16.mxu0 0
  %1027 = vmatpush1.bf16.msra.mxu0 %v812
  %1028 = vmatprep.subr.bf16.mxu0 0
  %1029 = vmatpush1.bf16.msra.mxu0 %v813
  %1030 = vmatprep.subr.bf16.mxu0 0
  %1031 = vmatpush1.bf16.msra.mxu0 0
  %1032 = vmatprep.subr.bf16.mxu0 0
  %1033 = vmatpush1.bf16.msra.mxu0 0
  %1034 = vmatprep.subr.bf16.mxu0 0
  %1035 = vmatpush1.bf16.msra.mxu0 0
  %1036 = vmatprep.subr.bf16.mxu0 0
  %1037 = vmatpush1.bf16.msra.mxu0 0
  %1038 = vmatprep.subr.bf16.mxu0 0
  %1039 = vmatpush1.bf16.msra.mxu0 0
  %1040 = vmatprep.subr.bf16.mxu0 0
  %1041 = vmatpush1.bf16.msra.mxu0 0
  %1042 = vmatprep.subr.bf16.mxu0 0
  %1043 = vmatpush1.bf16.msra.mxu0 0
  %1044 = vmatprep.subr.bf16.mxu0 0
  %1045 = vmatpush1.bf16.msra.mxu0 0
  %1046 = vmatprep.subr.bf16.mxu0 0
  %1047 = vmatpush1.bf16.msra.mxu0 0
  %1048 = vmatprep.subr.bf16.mxu0 0
  %1049 = vmatpush1.bf16.msra.mxu0 0
  %1050 = vmatprep.subr.bf16.mxu0 0
  %1051 = vmatpush1.bf16.msra.mxu0 0
  %1052 = vmatprep.subr.bf16.mxu0 0
  %1053 = vmatpush1.bf16.msra.mxu0 0
  %1054 = vmatprep.subr.bf16.mxu0 0
  %1055 = vmatpush1.bf16.msra.mxu0 0
  %1056 = vmatprep.subr.bf16.mxu0 0
  %1057 = vmatpush1.bf16.msra.mxu0 0
  %1058 = vmatprep.mubr.bf16.mxu0 0
  %1059 = vmatmul.mubr.bf16.gmra.mrb[0].mxu0 %v1024
  %v1060 = vpop.f32.mrb[0].mxu0
  %v1061 = vadd.f32 0.0, %v1060
  %v1062 = vpop.f32.mrb[0].mxu0
  %v1063 = vpop.f32.mrb[0].mxu0
  %v1064 = vpop.f32.mrb[0].mxu0
  %1065 = vdwg.mxu0
  %v1066 = vadd.f32 %v781, %v1061
  %v1067 = vmul.f32 %v1066, 0.5
  %v1068 = vtanh.pop %v1067
  %v1069 = vmul.f32 %v1068, 0.5
  %v1070 = vadd.f32 %v1069, 0.5
  %v1071 = vtanh.pop %v1066
  %v1072 = vmul.f32 %v1070, %v1012
  %1074 = vrot.lane.b32.xlu0 %v1071, 64
  %v1075 = vpop.permute.xlu0 %1074
  %v1077 = vmul.f32 %v1070, %v1075
  %1079 = vrot.lane.b32.xlu0 %v1077, 32
  %v1080 = vpop.permute.xlu0 %1079
  %v1082 = vadd.f32 %v1072, %v1080
  %v1083 = vtanh.pop %v1082
  %1085 = vrot.lane.b32.xlu0 %v1083, 64
  %v1086 = vpop.permute.xlu0 %1085
  %v1088 = vmul.f32 %v1070, %v1086
  %v1089 = vpack.c.bf16 %v1088, %v1088
  %1091 = vrot.lane.b32.xlu0 %v1089, 32
  %v1092 = vpop.permute.xlu0 %1091
  %v1094 = vsel %vm127, %v1092, 0
  %1096 = vmatprep.subr.bf16.mxu0 0
  %1097 = vmatpush1.bf16.msra.mxu0 %v812
  %1098 = vmatprep.subr.bf16.mxu0 0
  %1099 = vmatpush1.bf16.msra.mxu0 %v813
  %1100 = vmatprep.subr.bf16.mxu0 0
  %1101 = vmatpush1.bf16.msra.mxu0 0
  %1102 = vmatprep.subr.bf16.mxu0 0
  %1103 = vmatpush1.bf16.msra.mxu0 0
  %1104 = vmatprep.subr.bf16.mxu0 0
  %1105 = vmatpush1.bf16.msra.mxu0 0
  %1106 = vmatprep.subr.bf16.mxu0 0
  %1107 = vmatpush1.bf16.msra.mxu0 0
  %1108 = vmatprep.subr.bf16.mxu0 0
  %1109 = vmatpush1.bf16.msra.mxu0 0
  %1110 = vmatprep.subr.bf16.mxu0 0
  %1111 = vmatpush1.bf16.msra.mxu0 0
  %1112 = vmatprep.subr.bf16.mxu0 0
  %1113 = vmatpush1.bf16.msra.mxu0 0
  %1114 = vmatprep.subr.bf16.mxu0 0
  %1115 = vmatpush1.bf16.msra.mxu0 0
  %1116 = vmatprep.subr.bf16.mxu0 0
  %1117 = vmatpush1.bf16.msra.mxu0 0
  %1118 = vmatprep.subr.bf16.mxu0 0
  %1119 = vmatpush1.bf16.msra.mxu0 0
  %1120 = vmatprep.subr.bf16.mxu0 0
  %1121 = vmatpush1.bf16.msra.mxu0 0
  %1122 = vmatprep.subr.bf16.mxu0 0
  %1123 = vmatpush1.bf16.msra.mxu0 0
  %1124 = vmatprep.subr.bf16.mxu0 0
  %1125 = vmatpush1.bf16.msra.mxu0 0
  %1126 = vmatprep.subr.bf16.mxu0 0
  %1127 = vmatpush1.bf16.msra.mxu0 0
  %1128 = vmatprep.mubr.bf16.mxu0 0
  %1129 = vmatmul.mubr.bf16.gmra.mrb[0].mxu0 %v1094
  %v1130 = vpop.f32.mrb[0].mxu0
  %v1131 = vadd.f32 0.0, %v1130
  %v1132 = vpop.f32.mrb[0].mxu0
  %v1133 = vpop.f32.mrb[0].mxu0
  %v1134 = vpop.f32.mrb[0].mxu0
  %1135 = vdwg.mxu0
  %v1136 = vadd.f32 %v786, %v1131
  %v1137 = vmul.f32 %v1136, 0.5
  %v1138 = vtanh.pop %v1137
  %v1139 = vmul.f32 %v1138, 0.5
  %v1140 = vadd.f32 %v1139, 0.5
  %v1141 = vtanh.pop %v1136
  %v1142 = vmul.f32 %v1140, %v1082
  %1144 = vrot.lane.b32.xlu0 %v1141, 64
  %v1145 = vpop.permute.xlu0 %1144
  %v1147 = vmul.f32 %v1140, %v1145
  %1149 = vrot.lane.b32.xlu0 %v1147, 32
  %v1150 = vpop.permute.xlu0 %1149
  %v1152 = vadd.f32 %v1142, %v1150
  %v1153 = vtanh.pop %v1152
  %1155 = vrot.lane.b32.xlu0 %v1153, 64
  %v1156 = vpop.permute.xlu0 %1155
  %v1158 = vmul.f32 %v1140, %v1156
  %v1159 = vpack.c.bf16 %v1158, %v1158
  %1161 = vrot.lane.b32.xlu0 %v1159, 32
  %v1162 = vpop.permute.xlu0 %1161
  %v1164 = vsel %vm127, %v1162, 0
  %1166 = vmatprep.subr.bf16.mxu0 0
  %1167 = vmatpush1.bf16.msra.mxu0 %v812
  %1168 = vmatprep.subr.bf16.mxu0 0
  %1169 = vmatpush1.bf16.msra.mxu0 %v813
  %1170 = vmatprep.subr.bf16.mxu0 0
  %1171 = vmatpush1.bf16.msra.mxu0 0
  %1172 = vmatprep.subr.bf16.mxu0 0
  %1173 = vmatpush1.bf16.msra.mxu0 0
  %1174 = vmatprep.subr.bf16.mxu0 0
  %1175 = vmatpush1.bf16.msra.mxu0 0
  %1176 = vmatprep.subr.bf16.mxu0 0
  %1177 = vmatpush1.bf16.msra.mxu0 0
  %1178 = vmatprep.subr.bf16.mxu0 0
  %1179 = vmatpush1.bf16.msra.mxu0 0
  %1180 = vmatprep.subr.bf16.mxu0 0
  %1181 = vmatpush1.bf16.msra.mxu0 0
  %1182 = vmatprep.subr.bf16.mxu0 0
  %1183 = vmatpush1.bf16.msra.mxu0 0
  %1184 = vmatprep.subr.bf16.mxu0 0
  %1185 = vmatpush1.bf16.msra.mxu0 0
  %1186 = vmatprep.subr.bf16.mxu0 0
  %1187 = vmatpush1.bf16.msra.mxu0 0
  %1188 = vmatprep.subr.bf16.mxu0 0
  %1189 = vmatpush1.bf16.msra.mxu0 0
  %1190 = vmatprep.subr.bf16.mxu0 0
  %1191 = vmatpush1.bf16.msra.mxu0 0
  %1192 = vmatprep.subr.bf16.mxu0 0
  %1193 = vmatpush1.bf16.msra.mxu0 0
  %1194 = vmatprep.subr.bf16.mxu0 0
  %1195 = vmatpush1.bf16.msra.mxu0 0
  %1196 = vmatprep.subr.bf16.mxu0 0
  %1197 = vmatpush1.bf16.msra.mxu0 0
  %1198 = vmatprep.mubr.bf16.mxu0 0
  %1199 = vmatmul.mubr.bf16.gmra.mrb[0].mxu0 %v1164
  %v1200 = vpop.f32.mrb[0].mxu0
  %v1201 = vadd.f32 0.0, %v1200
  %v1202 = vpop.f32.mrb[0].mxu0
  %v1203 = vpop.f32.mrb[0].mxu0
  %v1204 = vpop.f32.mrb[0].mxu0
  %1205 = vdwg.mxu0
  %v1206 = vadd.f32 %v789, %v1201
  %v1207 = vmul.f32 %v1206, 0.5
  %v1208 = vtanh.pop %v1207
  %v1209 = vmul.f32 %v1208, 0.5
  %v1210 = vadd.f32 %v1209, 0.5
  %v1211 = vtanh.pop %v1206
  %v1212 = vmul.f32 %v1210, %v1152
  %1214 = vrot.lane.b32.xlu0 %v1211, 64
  %v1215 = vpop.permute.xlu0 %1214
  %v1217 = vmul.f32 %v1210, %v1215
  %1219 = vrot.lane.b32.xlu0 %v1217, 32
  %v1220 = vpop.permute.xlu0 %1219
  %v1222 = vadd.f32 %v1212, %v1220
  %v1223 = vtanh.pop %v1222
  %1225 = vrot.lane.b32.xlu0 %v1223, 64
  %v1226 = vpop.permute.xlu0 %1225
  %v1228 = vmul.f32 %v1210, %v1226
  %v1229 = vpack.c.bf16 %v1228, %v1228
  %1231 = vrot.lane.b32.xlu0 %v1229, 32
  %v1232 = vpop.permute.xlu0 %1231
  %v1234 = vsel %vm127, %v1232, 0
  %1236 = vmatprep.subr.bf16.mxu0 0
  %1237 = vmatpush1.bf16.msra.mxu0 %v812
  %1238 = vmatprep.subr.bf16.mxu0 0
  %1239 = vmatpush1.bf16.msra.mxu0 %v813
  %1240 = vmatprep.subr.bf16.mxu0 0
  %1241 = vmatpush1.bf16.msra.mxu0 0
  %1242 = vmatprep.subr.bf16.mxu0 0
  %1243 = vmatpush1.bf16.msra.mxu0 0
  %1244 = vmatprep.subr.bf16.mxu0 0
  %1245 = vmatpush1.bf16.msra.mxu0 0
  %1246 = vmatprep.subr.bf16.mxu0 0
  %1247 = vmatpush1.bf16.msra.mxu0 0
  %1248 = vmatprep.subr.bf16.mxu0 0
  %1249 = vmatpush1.bf16.msra.mxu0 0
  %1250 = vmatprep.subr.bf16.mxu0 0
  %1251 = vmatpush1.bf16.msra.mxu0 0
  %1252 = vmatprep.subr.bf16.mxu0 0
  %1253 = vmatpush1.bf16.msra.mxu0 0
  %1254 = vmatprep.subr.bf16.mxu0 0
  %1255 = vmatpush1.bf16.msra.mxu0 0
  %1256 = vmatprep.subr.bf16.mxu0 0
  %1257 = vmatpush1.bf16.msra.mxu0 0
  %1258 = vmatprep.subr.bf16.mxu0 0
  %1259 = vmatpush1.bf16.msra.mxu0 0
  %1260 = vmatprep.subr.bf16.mxu0 0
  %1261 = vmatpush1.bf16.msra.mxu0 0
  %1262 = vmatprep.subr.bf16.mxu0 0
  %1263 = vmatpush1.bf16.msra.mxu0 0
  %1264 = vmatprep.subr.bf16.mxu0 0
  %1265 = vmatpush1.bf16.msra.mxu0 0
  %1266 = vmatprep.subr.bf16.mxu0 0
  %1267 = vmatpush1.bf16.msra.mxu0 0
  %1268 = vmatprep.mubr.bf16.mxu0 0
  %1269 = vmatmul.mubr.bf16.gmra.mrb[0].mxu0 %v1234
  %v1270 = vpop.f32.mrb[0].mxu0
  %v1271 = vadd.f32 0.0, %v1270
  %v1272 = vpop.f32.mrb[0].mxu0
  %v1273 = vpop.f32.mrb[0].mxu0
  %v1274 = vpop.f32.mrb[0].mxu0
  %1275 = vdwg.mxu0
  %v1276 = vadd.f32 %v794, %v1271
  %v1277 = vmul.f32 %v1276, 0.5
  %v1278 = vtanh.pop %v1277
  %v1279 = vmul.f32 %v1278, 0.5
  %v1280 = vadd.f32 %v1279, 0.5
  %v1281 = vtanh.pop %v1276
  %v1282 = vmul.f32 %v1280, %v1222
  %1284 = vrot.lane.b32.xlu0 %v1281, 64
  %v1285 = vpop.permute.xlu0 %1284
  %v1287 = vmul.f32 %v1280, %v1285
  %1289 = vrot.lane.b32.xlu0 %v1287, 32
  %v1290 = vpop.permute.xlu0 %1289
  %v1292 = vadd.f32 %v1282, %v1290
  %v1293 = vtanh.pop %v1292
  %1295 = vrot.lane.b32.xlu0 %v1293, 64
  %v1296 = vpop.permute.xlu0 %1295
  %v1298 = vmul.f32 %v1280, %v1296
  %v1299 = vpack.c.bf16 %v1298, %v1298
  %1301 = vrot.lane.b32.xlu0 %v1299, 32
  %v1302 = vpop.permute.xlu0 %1301
  %v1304 = vsel %vm127, %v1302, 0
  %1306 = vmatprep.subr.bf16.mxu0 0
  %1307 = vmatpush1.bf16.msra.mxu0 %v812
  %1308 = vmatprep.subr.bf16.mxu0 0
  %1309 = vmatpush1.bf16.msra.mxu0 %v813
  %1310 = vmatprep.subr.bf16.mxu0 0
  %1311 = vmatpush1.bf16.msra.mxu0 0
  %1312 = vmatprep.subr.bf16.mxu0 0
  %1313 = vmatpush1.bf16.msra.mxu0 0
  %1314 = vmatprep.subr.bf16.mxu0 0
  %1315 = vmatpush1.bf16.msra.mxu0 0
  %1316 = vmatprep.subr.bf16.mxu0 0
  %1317 = vmatpush1.bf16.msra.mxu0 0
  %1318 = vmatprep.subr.bf16.mxu0 0
  %1319 = vmatpush1.bf16.msra.mxu0 0
  %1320 = vmatprep.subr.bf16.mxu0 0
  %1321 = vmatpush1.bf16.msra.mxu0 0
  %1322 = vmatprep.subr.bf16.mxu0 0
  %1323 = vmatpush1.bf16.msra.mxu0 0
  %1324 = vmatprep.subr.bf16.mxu0 0
  %1325 = vmatpush1.bf16.msra.mxu0 0
  %1326 = vmatprep.subr.bf16.mxu0 0
  %1327 = vmatpush1.bf16.msra.mxu0 0
  %1328 = vmatprep.subr.bf16.mxu0 0
  %1329 = vmatpush1.bf16.msra.mxu0 0
  %1330 = vmatprep.subr.bf16.mxu0 0
  %1331 = vmatpush1.bf16.msra.mxu0 0
  %1332 = vmatprep.subr.bf16.mxu0 0
  %1333 = vmatpush1.bf16.msra.mxu0 0
  %1334 = vmatprep.subr.bf16.mxu0 0
  %1335 = vmatpush1.bf16.msra.mxu0 0
  %1336 = vmatprep.subr.bf16.mxu0 0
  %1337 = vmatpush1.bf16.msra.mxu0 0
  %1338 = vmatprep.mubr.bf16.mxu0 0
  %1339 = vmatmul.mubr.bf16.gmra.mrb[0].mxu0 %v1304
  %v1340 = vpop.f32.mrb[0].mxu0
  %v1341 = vadd.f32 0.0, %v1340
  %v1342 = vpop.f32.mrb[0].mxu0
  %v1343 = vpop.f32.mrb[0].mxu0
  %v1344 = vpop.f32.mrb[0].mxu0
  %1345 = vdwg.mxu0
  %v1346 = vadd.f32 %v797, %v1341
  %v1347 = vmul.f32 %v1346, 0.5
  %v1348 = vtanh.pop %v1347
  %v1349 = vmul.f32 %v1348, 0.5
  %v1350 = vadd.f32 %v1349, 0.5
  %v1351 = vtanh.pop %v1346
  %v1352 = vmul.f32 %v1350, %v1292
  %1354 = vrot.lane.b32.xlu0 %v1351, 64
  %v1355 = vpop.permute.xlu0 %1354
  %v1357 = vmul.f32 %v1350, %v1355
  %1359 = vrot.lane.b32.xlu0 %v1357, 32
  %v1360 = vpop.permute.xlu0 %1359
  %v1362 = vadd.f32 %v1352, %v1360
  %v1363 = vtanh.pop %v1362
  %1365 = vrot.lane.b32.xlu0 %v1363, 64
  %v1366 = vpop.permute.xlu0 %1365
  %v1368 = vmul.f32 %v1350, %v1366
  %v1369 = vpack.c.bf16 %v948, %v878
  %v1370 = vpack.c.bf16 %v1088, %v1018
  %v1371 = vpack.c.bf16 %v1228, %v1158
  %v1372 = vpack.c.bf16 %v1368, %v1298
  %v1373 = vld [vmem:[%s7] sm:$0xf]
  %v1374 = vld [vmem:[%s7 + $0x4] sm:$0xf]
  %v1375 = vld [vmem:[%s7 + $0x8] sm:$0xf]
  %v1376 = vld [vmem:[%s7 + $0xc] sm:$0xf]
  %v1377 = vld [vmem:[%s8] sm:$0x1]
  %v1379 = vlaneseq
  %v1380 = vshrl.u32 %v1379, 7
  %v1381 = vsub.s32 0, %v1380
  %v1382 = vrot.slane %v1377, %v1381
  %1388 = vrot.lane.b32.xlu0 %v1369, 32
  %v1389 = vpop.permute.xlu0 %1388
  %1390 = vrot.lane.b32.xlu0 %v1370, 32
  %v1391 = vpop.permute.xlu0 %1390
  %1392 = vrot.lane.b32.xlu0 %v1371, 32
  %v1393 = vpop.permute.xlu0 %1392
  %1394 = vrot.lane.b32.xlu0 %v1372, 32
  %v1395 = vpop.permute.xlu0 %1394
  %v1400 = vunpack.c.l.b16 %v1373
  %v1401 = vunpack.c.l.b16 %v1374
  %v1402 = vunpack.c.l.b16 %v1375
  %v1403 = vunpack.c.l.b16 %v1376
  %v1404 = vpack.c.b16 %v1401, %v1400
  %v1405 = vpack.c.b16 %v1403, %v1402
  %v1409 = vsel %vm127, %v1389, 0
  %v1412 = vsel %vm127, %v1391, 0
  %v1415 = vsel %vm127, %v1393, 0
  %v1418 = vsel %vm127, %v1395, 0
  %1420 = vmatprep.subr.bf16.mxu0 0
  %1421 = vmatpush1.bf16.msra.mxu0 %v1404
  %1422 = vmatprep.subr.bf16.mxu0 0
  %1423 = vmatpush1.bf16.msra.mxu0 %v1405
  %1424 = vmatprep.subr.bf16.mxu0 0
  %1425 = vmatpush1.bf16.msra.mxu0 0
  %1426 = vmatprep.subr.bf16.mxu0 0
  %1427 = vmatpush1.bf16.msra.mxu0 0
  %1428 = vmatprep.subr.bf16.mxu0 0
  %1429 = vmatpush1.bf16.msra.mxu0 0
  %1430 = vmatprep.subr.bf16.mxu0 0
  %1431 = vmatpush1.bf16.msra.mxu0 0
  %1432 = vmatprep.subr.bf16.mxu0 0
  %1433 = vmatpush1.bf16.msra.mxu0 0
  %1434 = vmatprep.subr.bf16.mxu0 0
  %1435 = vmatpush1.bf16.msra.mxu0 0
  %1436 = vmatprep.subr.bf16.mxu0 0
  %1437 = vmatpush1.bf16.msra.mxu0 0
  %1438 = vmatprep.subr.bf16.mxu0 0
  %1439 = vmatpush1.bf16.msra.mxu0 0
  %1440 = vmatprep.subr.bf16.mxu0 0
  %1441 = vmatpush1.bf16.msra.mxu0 0
  %1442 = vmatprep.subr.bf16.mxu0 0
  %1443 = vmatpush1.bf16.msra.mxu0 0
  %1444 = vmatprep.subr.bf16.mxu0 0
  %1445 = vmatpush1.bf16.msra.mxu0 0
  %1446 = vmatprep.subr.bf16.mxu0 0
  %1447 = vmatpush1.bf16.msra.mxu0 0
  %1448 = vmatprep.subr.bf16.mxu0 0
  %1449 = vmatpush1.bf16.msra.mxu0 0
  %1450 = vmatprep.subr.bf16.mxu0 0
  %1451 = vmatpush1.bf16.msra.mxu0 0
  %1452 = vmatprep.mubr.bf16.mxu0 0
  %1453 = vmatmul.mubr.bf16.gmra.mrb[0].mxu0 %v1409
  %v1454 = vpop.f32.mrb[0].mxu0
  %v1455 = vadd.f32 %v1382, %v1454
  %v1456 = vpop.f32.mrb[0].mxu0
  %v1457 = vpop.f32.mrb[0].mxu0
  %v1458 = vadd.f32 %v1382, %v1457
  %v1459 = vpop.f32.mrb[0].mxu0
  %1460 = vmatprep.mubr.bf16.mxu0 0
  %1461 = vmatmul.mubr.bf16.gmra.mrb[0].mxu0 %v1412
  %v1462 = vpop.f32.mrb[0].mxu0
  %v1463 = vadd.f32 %v1382, %v1462
  %v1464 = vpop.f32.mrb[0].mxu0
  %v1465 = vpop.f32.mrb[0].mxu0
  %v1466 = vadd.f32 %v1382, %v1465
  %v1467 = vpop.f32.mrb[0].mxu0
  %1468 = vmatprep.mubr.bf16.mxu0 0
  %1469 = vmatmul.mubr.bf16.gmra.mrb[0].mxu0 %v1415
  %v1470 = vpop.f32.mrb[0].mxu0
  %v1471 = vadd.f32 %v1382, %v1470
  %v1472 = vpop.f32.mrb[0].mxu0
  %v1473 = vpop.f32.mrb[0].mxu0
  %v1474 = vadd.f32 %v1382, %v1473
  %v1475 = vpop.f32.mrb[0].mxu0
  %1476 = vmatprep.mubr.bf16.mxu0 0
  %1477 = vmatmul.mubr.bf16.gmra.mrb[0].mxu0 %v1418
  %v1478 = vpop.f32.mrb[0].mxu0
  %v1479 = vadd.f32 %v1382, %v1478
  %v1480 = vpop.f32.mrb[0].mxu0
  %v1481 = vpop.f32.mrb[0].mxu0
  %v1482 = vadd.f32 %v1382, %v1481
  %v1483 = vpop.f32.mrb[0].mxu0
  %1484 = vdwg.mxu0
  %1485 = vst [vmem:[%s9] sm:$0xff] %v1455
  %1486 = vst [vmem:[%s9 + $0x8] sm:$0xff] %v1458
  %1487 = vst [vmem:[%s9 + $0x10] sm:$0xff] %v1463
  %1488 = vst [vmem:[%s9 + $0x18] sm:$0xff] %v1466
  %1489 = vst [vmem:[%s9 + $0x20] sm:$0xff] %v1471
  %1490 = vst [vmem:[%s9 + $0x28] sm:$0xff] %v1474
  %1491 = vst [vmem:[%s9 + $0x30] sm:$0xff] %v1479
  %1492 = vst [vmem:[%s9 + $0x38] sm:$0xff] %v1482
  // Predicated region
  $region38: #{lstm_regression_forward.1} parent=0 // pred_check
    _
  $region39: #{lstm_regression_forward.1} parent=0 // pred_check_branch
    %1494 = sbr.rel (0) target = $region41
  $region40: #{lstm_regression_forward.1} parent=0 // pred_region
    _
  $region41: #{lstm_regression_forward.1} parent=0 // pred_fallthru
    _
  // Predicated region
  $region42: #{lstm_regression_forward.1} parent=0 // pred_check
    _
  $region43: #{lstm_regression_forward.1} parent=0 // pred_check_branch
    %1496 = sbr.rel (0) target = $region45
  $region44: #{lstm_regression_forward.1} parent=0 // pred_region
    _
  $region45: #{lstm_regression_forward.1} parent=0 // pred_fallthru
    _

</llo_original>
